<compile_context>
chip_gen: v5e
topology: v5e:2x2
jax: 0.10.0
libtpu: 0.0.40
codegen_flags: <defaults>
</compile_context>

<pallas_src>
import functools

import jax
import jax.numpy as jnp
from jax.experimental import pallas as pl
from jax.experimental.pallas import tpu as pltpu

_LN_EPS = 1e-5
_SQRT_HALF = 0.7071067811865476

# Rough count of live f32 (TILE_H*W, C) buffers per grid step (double-buffered
# in/out blocks + conv/GELU temporaries); only used to size TILE_H.
_LIVE_F32_PER_TILE_ROW = 20


def _erf(x):
    """float32 erf, Abramowitz-Stegun 7.1.26 (|err| <= ~1.5e-7).

    exp and the reciprocal ride the EUP slot; one Newton step refines the
    approx reciprocal (raw ~2^-12 rel error would leak into GELU at trained
    gamma_1 scales)."""
    a = jnp.abs(x)
    d = 1.0 + 0.3275911 * a
    t = pl.reciprocal(d, approx=True)
    t = t * (2.0 - d * t)                      # one Newton-Raphson refinement
    poly = t * (0.254829592 + t * (-0.284496736 + t * (1.421413741
           + t * (-1.453152027 + t * 1.061405429))))
    y = 1.0 - poly * jnp.exp(-a * a)
    return jnp.where(x >= 0.0, y, -y)


def _gelu_exact(x):
    return 0.5 * x * (1.0 + _erf(x * _SQRT_HALF))


def _dwconv3x3_ext(ext, w_ref, b_ref, *, W):
    """Depthwise 3x3 conv (zero pad 1) on a halo-extended flat tile.

    ext: (L + 2W, C) f32 = [row above ; TILE_H tile rows ; row below]; halo
         rows are already zeroed when the tile touches the image border.
    Returns the (L, C) conv output for the tile rows.

    W-neighbour taps: pltpu.roll by +/-1 on the flat (sublane) axis + w-border
    masks (the cyclic / cross-row wrap only lands on masked columns).
    H-neighbour taps: each row's "send to the row below/above" contribution is
    rolled by +/-W; wrapped junk lands only on the halo rows, sliced away."""
    L2 = ext.shape[0]
    L = L2 - 2 * W
    col = jax.lax.broadcasted_iota(jnp.int32, ext.shape, 0) % W
    vl = jnp.where(col == 0, 0.0, pltpu.roll(ext, 1, axis=0))          # (h, w-1)
    vr = jnp.where(col == W - 1, 0.0, pltpu.roll(ext, L2 - 1, axis=0))  # (h, w+1)

    # centre row taps; accumulator starts from centre tap + bias (no zeros init)
    acc = ext * w_ref[1, 1] + b_ref[...] + vl * w_ref[1, 0] + vr * w_ref[1, 2]
    # contribution each row sends to the row below (kh=0) / above (kh=2)
    send_dn = vl * w_ref[0, 0] + ext * w_ref[0, 1] + vr * w_ref[0, 2]
    send_up = vl * w_ref[2, 0] + ext * w_ref[2, 1] + vr * w_ref[2, 2]
    acc = acc + pltpu.roll(send_dn, W, axis=0) + pltpu.roll(send_up, L2 - W, axis=0)
    return acc[W:W + L]


def _pass1_kernel(x_ref, xt_ref, xb_ref, lnw_ref, lnb_ref, w_ref, b_ref,
                  y_ref, psum_ref, *, W, eps):
    t = pl.program_id(1)
    lnw = lnw_ref[...]
    lnb = lnb_ref[...]

    def ln(v):
        v = v.astype(jnp.float32)
        mean = jnp.mean(v, axis=-1, keepdims=True)
        c = v - mean
        var = jnp.mean(c * c, axis=-1, keepdims=True)
        return c * jax.lax.rsqrt(var + eps) * lnw + lnb

    # Halo rows: LayerNorm first, then zero at image borders (the conv's zero
    # padding applies to the conv *input*, i.e. post-LN values).
    top = ln(xt_ref[0]) * jnp.where(t == 0, 0.0, 1.0)
    bot = ln(xb_ref[0]) * jnp.where(t == pl.num_programs(1) - 1, 0.0, 1.0)
    ext = jnp.concatenate([top, ln(x_ref[0]), bot], axis=0)     # (L+2W, C)

    y = _gelu_exact(_dwconv3x3_ext(ext, w_ref, b_ref, W=W))
    y_ref[0] = y.astype(y_ref.dtype)
    # per-tile channel sums for the SqueezeExcite global pool
    psum_ref[0, 0] = jnp.sum(y, axis=0, keepdims=True)


def _pass2_kernel(x_ref, y1_ref, yt_ref, yb_ref, gate_ref, w_ref, b_ref,
                  gamma_ref, o_ref, *, W):
    t = pl.program_id(1)
    g = gate_ref[0]                                             # (1, C)
    top = yt_ref[0] * (g * jnp.where(t == 0, 0.0, 1.0))
    bot = yb_ref[0] * (g * jnp.where(t == pl.num_programs(1) - 1, 0.0, 1.0))
    ext = jnp.concatenate([top, y1_ref[0] * g, bot], axis=0)    # (L+2W, C)
    y = _dwconv3x3_ext(ext, w_ref, b_ref, W=W)
    # residual read only here -> no long live range for the pre-LN activation
    o_ref[0] = (x_ref[0] + gamma_ref[...] * y).astype(o_ref.dtype)


def _vmem_limit_bytes():
    cap = 64 * 2 ** 20          # conservative default (v7x physical VMEM / TC)
    try:
        cap = int(getattr(pltpu.get_tpu_info(), "vmem_capacity_bytes", cap))
    except Exception:
        pass
    # ~25% headroom for compiler scratch: 48 MiB on v7x, 96 MiB on v5e/v6e.
    return max(32 * 2 ** 20, (cap * 3) // 4)


def _pick_tile_h(H, W, C, budget_bytes):
    """Largest divisor of H whose tile + live temporaries fit the budget,
    preferring sublane-aligned (TILE_H * W % 8 == 0) flat tiles."""
    row_bytes = W * C * 4
    fits = [d for d in range(1, H + 1)
            if H % d == 0 and _LIVE_F32_PER_TILE_ROW * d * row_bytes <= budget_bytes]
    if not fits:
        return 1
    aligned = [d for d in fits if (d * W) % 8 == 0]
    return max(aligned) if aligned else max(fits)


def layer_scale_init_block(x, params, hw_shape, *, tile_h=None):
    """x: (B, N, C) float32 tokens, N == H*W.  Returns (B, N, C)."""
    H, W = hw_shape
    B, N, C = x.shape
    assert N == H * W
    ln_w, ln_b, w1, b1, sw1, sb1, sw2, sb2, w2, b2, gamma = params

    vmem_limit = _vmem_limit_bytes()
    TH = tile_h if tile_h is not None else _pick_tile_h(H, W, C, vmem_limit)
    assert H % TH == 0, "tile_h must divide H"
    nT = H // TH
    L = TH * W
    # TODO(synk): for W % 8 != 0 the (1, W, C) halo blocks / flat tile are not
    # sublane aligned (relayout cost only; semantics unchanged).
    # TODO(synk): for tiny H*W*C, additionally block several batch samples per
    # grid step to amortize the ~0.35us fixed per-step cost.

    tile_idx = lambda b, t: (b, t, 0)
    top_idx = lambda b, t: (b, jnp.maximum(t * TH - 1, 0), 0)        # row above
    bot_idx = lambda b, t: (b, jnp.minimum((t + 1) * TH, H - 1), 0)  # row below
    tile_spec = pl.BlockSpec((1, L, C), tile_idx)
    row_top_spec = pl.BlockSpec((1, W, C), top_idx)
    row_bot_spec = pl.BlockSpec((1, W, C), bot_idx)
    vec_spec = pl.BlockSpec((1, C), lambda b, t: (0, 0))
    w33_spec = pl.BlockSpec((3, 3, C), lambda b, t: (0, 0, 0))

    cparams = pltpu.CompilerParams(
        dimension_semantics=("parallel", "parallel"),
        vmem_limit_bytes=vmem_limit)

    # ---- pass 1: LayerNorm + dwconv1 + GELU, per-tile SE pool sums ----
    y1, psum = pl.pallas_call(
        functools.partial(_pass1_kernel, W=W, eps=_LN_EPS),
        out_shape=(jax.ShapeDtypeStruct((B, N, C), jnp.float32),
                   jax.ShapeDtypeStruct((B, nT, 1, C), jnp.float32)),
        grid_spec=pltpu.PrefetchScalarGridSpec(
            num_scalar_prefetch=0,
            grid=(B, nT),
            in_specs=[tile_spec, row_top_spec, row_bot_spec,
                      vec_spec, vec_spec, w33_spec, vec_spec],
            out_specs=[tile_spec,
                       pl.BlockSpec((1, 1, 1, C), lambda b, t: (b, t, 0, 0))]),
        compiler_params=cparams,
    )(x, x, x, ln_w.reshape(1, C), ln_b.reshape(1, C), w1, b1.reshape(1, C))

    # ---- SqueezeExcite gate: tiny (B,C)x(C,rd)x(rd,C) MLP as XLA glue ----
    pool = jnp.sum(psum, axis=(1, 2)) * (1.0 / float(H * W))          # (B, C)
    hid = jnp.maximum(
        jnp.dot(pool, sw1, precision=jax.lax.Precision.HIGHEST) + sb1, 0.0)
    gate = jax.nn.sigmoid(
        jnp.dot(hid, sw2, precision=jax.lax.Precision.HIGHEST) + sb2)
    gate = gate.reshape(B, 1, C)

    # ---- pass 2: gate * y1 -> dwconv2 -> x + gamma_1 * (.) ----
    out = pl.pallas_call(
        functools.partial(_pass2_kernel, W=W),
        out_shape=jax.ShapeDtypeStruct((B, N, C), x.dtype),
        grid_spec=pltpu.PrefetchScalarGridSpec(
            num_scalar_prefetch=0,
            grid=(B, nT),
            in_specs=[tile_spec, tile_spec, row_top_spec, row_bot_spec,
                      pl.BlockSpec((1, 1, C), lambda b, t: (b, 0, 0)),
                      w33_spec, vec_spec, vec_spec],
            out_specs=tile_spec),
        compiler_params=cparams,
    )(x, y1, y1, y1, gate, w2, b2.reshape(1, C), gamma.reshape(1, C))
    return out


def reference(x, params, H, W):
    """Pure-JAX reference matching the PyTorch forward (f32-accurate)."""
    ln_w, ln_b, w1, b1, sw1, sb1, sw2, sb2, w2, b2, gamma = params
    B, N, C = x.shape
    mean = x.mean(-1, keepdims=True)
    var = ((x - mean) ** 2).mean(-1, keepdims=True)
    xn = (x - mean) / jnp.sqrt(var + _LN_EPS) * ln_w + ln_b

    def dwconv(a, w, b):
        return jax.lax.conv_general_dilated(
            a, w.reshape(3, 3, 1, C), (1, 1), "SAME",
            dimension_numbers=("NHWC", "HWIO", "NHWC"),
            feature_group_count=C,
            precision=jax.lax.Precision.HIGHEST) + b

    y = dwconv(xn.reshape(B, H, W, C), w1, b1)
    y = 0.5 * y * (1.0 + jax.scipy.special.erf(y / jnp.sqrt(2.0)))
    s = y.mean(axis=(1, 2))                                  # (B, C)
    h = jnp.maximum(jnp.dot(s, sw1, precision=jax.lax.Precision.HIGHEST) + sb1, 0.0)
    g = jax.nn.sigmoid(jnp.dot(h, sw2, precision=jax.lax.Precision.HIGHEST) + sb2)
    y = y * g[:, None, None, :]
    y = dwconv(y, w2, b2)
    return x + gamma * y.reshape(B, N, C)


if __name__ == "__main__":
    B, H, W, C = 2, 8, 8, 128          # dim=128 (lane aligned), N = 64 tokens
    N = H * W
    rd = C // 4                        # SqueezeExcite(rd_ratio=0.25)

    key = jax.random.PRNGKey(0)
    ks = jax.random.split(key, 12)
    x = jax.random.normal(ks[0], (B, N, C), jnp.float32)

    ln_w = 1.0 + 0.1 * jax.random.normal(ks[1], (C,), jnp.float32)
    ln_b = 0.1 * jax.random.normal(ks[2], (C,), jnp.float32)
    w1 = 0.2 * jax.random.normal(ks[3], (3, 3, C), jnp.float32)
    b1 = 0.1 * jax.random.normal(ks[4], (C,), jnp.float32)
    sw1 = 0.2 * jax.random.normal(ks[5], (C, rd), jnp.float32)
    sb1 = 0.1 * jax.random.normal(ks[6], (rd,), jnp.float32)
    sw2 = 0.2 * jax.random.normal(ks[7], (rd, C), jnp.float32)
    sb2 = 0.1 * jax.random.normal(ks[8], (C,), jnp.float32)
    w2 = 0.2 * jax.random.normal(ks[9], (3, 3, C), jnp.float32)
    b2 = 0.1 * jax.random.normal(ks[10], (C,), jnp.float32)
    # nn.Parameter is initialised at 1e-4, but trained gamma_1 is O(0.1-1);
    # use a trained-scale gamma so the branch accuracy is actually exercised.
    gamma = 0.3 * jax.random.normal(ks[11], (C,), jnp.float32)

    params = (ln_w, ln_b, w1, b1, sw1, sb1, sw2, sb2, w2, b2, gamma)
    ref = reference(x, params, H, W)

    # Forced 2-tile H-tiling exercises the halo / two-pass path ...
    out_tiled = jax.block_until_ready(
        layer_scale_init_block(x, params, (H, W), tile_h=4))
    # ... and the auto-tiled path (whole sample per step at this size).
    out_auto = jax.block_until_ready(
        layer_scale_init_block(x, params, (H, W)))

    assert out_tiled.shape == x.shape and out_tiled.dtype == x.dtype
    ok_tiled = bool(jnp.allclose(out_tiled, ref, atol=1e-5, rtol=1e-5))
    ok_auto = bool(jnp.allclose(out_auto, ref, atol=1e-5, rtol=1e-5))
    if not (ok_tiled and ok_auto):
        raise SystemExit("mismatch vs reference")
    print("KERNEL_OK")
</pallas_src>

<mosaic_0001>
module attributes {stable_mosaic.version = 11 : i64} {
  func.func @_pass1_kernel(%arg0: i32, %arg1: i32, %arg2: memref<1x32x128xf32, #tpu.memory_space<vmem>>, %arg3: memref<1x8x128xf32, #tpu.memory_space<vmem>>, %arg4: memref<1x8x128xf32, #tpu.memory_space<vmem>>, %arg5: memref<1x128xf32, #tpu.memory_space<vmem>>, %arg6: memref<1x128xf32, #tpu.memory_space<vmem>>, %arg7: memref<3x3x128xf32, #tpu.memory_space<vmem>>, %arg8: memref<1x128xf32, #tpu.memory_space<vmem>>, %arg9: memref<1x32x128xf32, #tpu.memory_space<vmem>>, %arg10: memref<1x1x1x128xf32, #tpu.memory_space<vmem>>) attributes {dimension_semantics = [#tpu.dimension_semantics<parallel>, #tpu.dimension_semantics<parallel>], iteration_bounds = array<i64: 2, 2>, scalar_prefetch = 0 : i64, scratch_operands = 0 : i64, tpu.core_type = #tpu.core_type<tc>, window_params = [{transform_indices = @transform_0, window_bounds = array<i64: 1, 32, 128>}, {transform_indices = @transform_1, window_bounds = array<i64: 1, 8, 128>}, {transform_indices = @transform_2, window_bounds = array<i64: 1, 8, 128>}, {pipeline_mode = #tpu.pipeline_mode<synchronous>, transform_indices = @transform_3, window_bounds = array<i64: 1, 128>}, {pipeline_mode = #tpu.pipeline_mode<synchronous>, transform_indices = @transform_4, window_bounds = array<i64: 1, 128>}, {pipeline_mode = #tpu.pipeline_mode<synchronous>, transform_indices = @transform_5, window_bounds = array<i64: 3, 3, 128>}, {pipeline_mode = #tpu.pipeline_mode<synchronous>, transform_indices = @transform_6, window_bounds = array<i64: 1, 128>}, {transform_indices = @transform_7, window_bounds = array<i64: 1, 32, 128>}, {transform_indices = @transform_8, window_bounds = array<i64: 1, 1, 1, 128>}]} {
    %c0 = arith.constant 0 : index
    %c0_0 = arith.constant 0 : index
    %0 = vector.load %arg5[%c0, %c0_0] : memref<1x128xf32, #tpu.memory_space<vmem>>, vector<1x128xf32>
    %c0_1 = arith.constant 0 : index
    %c0_2 = arith.constant 0 : index
    %1 = vector.load %arg6[%c0_1, %c0_2] : memref<1x128xf32, #tpu.memory_space<vmem>>, vector<1x128xf32>
    %c0_3 = arith.constant 0 : index
    %c0_4 = arith.constant 0 : index
    %c0_5 = arith.constant 0 : index
    %2 = vector.load %arg3[%c0_3, %c0_4, %c0_5] : memref<1x8x128xf32, #tpu.memory_space<vmem>>, vector<1x8x128xf32>
    %3 = vector.shape_cast %2 : vector<1x8x128xf32> to vector<8x128xf32>
    %cst = arith.constant dense<0.000000e+00> : vector<8xf32>
    %4 = vector.multi_reduction <add>, %3, %cst [1] : vector<8x128xf32> to vector<8xf32>
    %5 = vector.shape_cast %4 : vector<8xf32> to vector<8x1xf32>
    %cst_6 = arith.constant 1.280000e+02 : f32
    %6 = vector.broadcast %cst_6 : f32 to vector<8x1xf32>
    %7 = arith.divf %5, %6 : vector<8x1xf32>
    %8 = vector.broadcast %7 : vector<8x1xf32> to vector<8x128xf32>
    %9 = arith.subf %3, %8 : vector<8x128xf32>
    %10 = arith.mulf %9, %9 : vector<8x128xf32>
    %cst_7 = arith.constant dense<0.000000e+00> : vector<8xf32>
    %11 = vector.multi_reduction <add>, %10, %cst_7 [1] : vector<8x128xf32> to vector<8xf32>
    %12 = vector.shape_cast %11 : vector<8xf32> to vector<8x1xf32>
    %cst_8 = arith.constant 1.280000e+02 : f32
    %13 = vector.broadcast %cst_8 : f32 to vector<8x1xf32>
    %14 = arith.divf %12, %13 : vector<8x1xf32>
    %cst_9 = arith.constant 9.99999974E-6 : f32
    %15 = vector.broadcast %cst_9 : f32 to vector<8x1xf32>
    %16 = arith.addf %14, %15 : vector<8x1xf32>
    %17 = math.rsqrt %16 : vector<8x1xf32>
    %18 = vector.broadcast %17 : vector<8x1xf32> to vector<8x128xf32>
    %19 = arith.mulf %9, %18 : vector<8x128xf32>
    %20 = vector.broadcast %0 : vector<1x128xf32> to vector<8x128xf32>
    %21 = arith.mulf %19, %20 : vector<8x128xf32>
    %22 = vector.broadcast %1 : vector<1x128xf32> to vector<8x128xf32>
    %23 = arith.addf %21, %22 : vector<8x128xf32>
    %c0_i32 = arith.constant 0 : i32
    %24 = arith.cmpi eq, %arg1, %c0_i32 : i32
    %cst_10 = arith.constant 0.000000e+00 : f32
    %cst_11 = arith.constant 1.000000e+00 : f32
    %25 = arith.select %24, %cst_10, %cst_11 : f32
    %26 = vector.broadcast %25 : f32 to vector<8x128xf32>
    %27 = arith.mulf %23, %26 : vector<8x128xf32>
    %c0_12 = arith.constant 0 : index
    %c0_13 = arith.constant 0 : index
    %c0_14 = arith.constant 0 : index
    %28 = vector.load %arg4[%c0_12, %c0_13, %c0_14] : memref<1x8x128xf32, #tpu.memory_space<vmem>>, vector<1x8x128xf32>
    %29 = vector.shape_cast %28 : vector<1x8x128xf32> to vector<8x128xf32>
    %cst_15 = arith.constant dense<0.000000e+00> : vector<8xf32>
    %30 = vector.multi_reduction <add>, %29, %cst_15 [1] : vector<8x128xf32> to vector<8xf32>
    %31 = vector.shape_cast %30 : vector<8xf32> to vector<8x1xf32>
    %cst_16 = arith.constant 1.280000e+02 : f32
    %32 = vector.broadcast %cst_16 : f32 to vector<8x1xf32>
    %33 = arith.divf %31, %32 : vector<8x1xf32>
    %34 = vector.broadcast %33 : vector<8x1xf32> to vector<8x128xf32>
    %35 = arith.subf %29, %34 : vector<8x128xf32>
    %36 = arith.mulf %35, %35 : vector<8x128xf32>
    %cst_17 = arith.constant dense<0.000000e+00> : vector<8xf32>
    %37 = vector.multi_reduction <add>, %36, %cst_17 [1] : vector<8x128xf32> to vector<8xf32>
    %38 = vector.shape_cast %37 : vector<8xf32> to vector<8x1xf32>
    %cst_18 = arith.constant 1.280000e+02 : f32
    %39 = vector.broadcast %cst_18 : f32 to vector<8x1xf32>
    %40 = arith.divf %38, %39 : vector<8x1xf32>
    %cst_19 = arith.constant 9.99999974E-6 : f32
    %41 = vector.broadcast %cst_19 : f32 to vector<8x1xf32>
    %42 = arith.addf %40, %41 : vector<8x1xf32>
    %43 = math.rsqrt %42 : vector<8x1xf32>
    %44 = vector.broadcast %43 : vector<8x1xf32> to vector<8x128xf32>
    %45 = arith.mulf %35, %44 : vector<8x128xf32>
    %46 = vector.broadcast %0 : vector<1x128xf32> to vector<8x128xf32>
    %47 = arith.mulf %45, %46 : vector<8x128xf32>
    %48 = vector.broadcast %1 : vector<1x128xf32> to vector<8x128xf32>
    %49 = arith.addf %47, %48 : vector<8x128xf32>
    %c1_i32 = arith.constant 1 : i32
    %50 = arith.cmpi eq, %arg1, %c1_i32 : i32
    %cst_20 = arith.constant 0.000000e+00 : f32
    %cst_21 = arith.constant 1.000000e+00 : f32
    %51 = arith.select %50, %cst_20, %cst_21 : f32
    %52 = vector.broadcast %51 : f32 to vector<8x128xf32>
    %53 = arith.mulf %49, %52 : vector<8x128xf32>
    %c0_22 = arith.constant 0 : index
    %c0_23 = arith.constant 0 : index
    %c0_24 = arith.constant 0 : index
    %54 = vector.load %arg2[%c0_22, %c0_23, %c0_24] : memref<1x32x128xf32, #tpu.memory_space<vmem>>, vector<1x32x128xf32>
    %55 = vector.shape_cast %54 : vector<1x32x128xf32> to vector<32x128xf32>
    %cst_25 = arith.constant dense<0.000000e+00> : vector<32xf32>
    %56 = vector.multi_reduction <add>, %55, %cst_25 [1] : vector<32x128xf32> to vector<32xf32>
    %57 = vector.shape_cast %56 : vector<32xf32> to vector<32x1xf32>
    %cst_26 = arith.constant 1.280000e+02 : f32
    %58 = vector.broadcast %cst_26 : f32 to vector<32x1xf32>
    %59 = arith.divf %57, %58 : vector<32x1xf32>
    %60 = vector.broadcast %59 : vector<32x1xf32> to vector<32x128xf32>
    %61 = arith.subf %55, %60 : vector<32x128xf32>
    %62 = arith.mulf %61, %61 : vector<32x128xf32>
    %cst_27 = arith.constant dense<0.000000e+00> : vector<32xf32>
    %63 = vector.multi_reduction <add>, %62, %cst_27 [1] : vector<32x128xf32> to vector<32xf32>
    %64 = vector.shape_cast %63 : vector<32xf32> to vector<32x1xf32>
    %cst_28 = arith.constant 1.280000e+02 : f32
    %65 = vector.broadcast %cst_28 : f32 to vector<32x1xf32>
    %66 = arith.divf %64, %65 : vector<32x1xf32>
    %cst_29 = arith.constant 9.99999974E-6 : f32
    %67 = vector.broadcast %cst_29 : f32 to vector<32x1xf32>
    %68 = arith.addf %66, %67 : vector<32x1xf32>
    %69 = math.rsqrt %68 : vector<32x1xf32>
    %70 = vector.broadcast %69 : vector<32x1xf32> to vector<32x128xf32>
    %71 = arith.mulf %61, %70 : vector<32x128xf32>
    %72 = vector.broadcast %0 : vector<1x128xf32> to vector<32x128xf32>
    %73 = arith.mulf %71, %72 : vector<32x128xf32>
    %74 = vector.broadcast %1 : vector<1x128xf32> to vector<32x128xf32>
    %75 = arith.addf %73, %74 : vector<32x128xf32>
    %76 = tpu.concatenate %27, %75, %53 in 0 : vector<8x128xf32>, vector<32x128xf32>, vector<8x128xf32> -> vector<48x128xf32>
    %77 = tpu.iota {dimensions = array<i32: 0>} : vector<48x128xi32>
    %c8_i32 = arith.constant 8 : i32
    %c0_i32_30 = arith.constant 0 : i32
    %78 = arith.cmpi eq, %c8_i32, %c0_i32_30 : i32
    %c1_i32_31 = arith.constant 1 : i32
    %79 = arith.select %78, %c1_i32_31, %c8_i32 : i32
    %80 = vector.broadcast %79 : i32 to vector<48x128xi32>
    %81 = arith.remsi %77, %80 : vector<48x128xi32>
    %c0_i32_32 = arith.constant 0 : i32
    %82 = vector.broadcast %c0_i32_32 : i32 to vector<48x128xi32>
    %83 = arith.cmpi ne, %81, %82 : vector<48x128xi32>
    %c0_i32_33 = arith.constant 0 : i32
    %84 = vector.broadcast %c0_i32_33 : i32 to vector<48x128xi32>
    %85 = arith.cmpi slt, %81, %84 : vector<48x128xi32>
    %c0_i32_34 = arith.constant 0 : i32
    %86 = arith.cmpi slt, %79, %c0_i32_34 : i32
    %87 = vector.broadcast %86 : i1 to vector<48x128xi1>
    %88 = vector.broadcast %87 : vector<48x128xi1> to vector<48x128xi1>
    %89 = arith.xori %85, %88 : vector<48x128xi1>
    %90 = arith.andi %89, %83 : vector<48x128xi1>
    %91 = vector.broadcast %79 : i32 to vector<48x128xi32>
    %92 = arith.addi %81, %91 : vector<48x128xi32>
    %93 = arith.select %90, %92, %81 : vector<48x128xi1>, vector<48x128xi32>
    %c0_i32_35 = arith.constant 0 : i32
    %94 = vector.broadcast %c0_i32_35 : i32 to vector<48x128xi32>
    %95 = arith.cmpi eq, %93, %94 : vector<48x128xi32>
    %c1_i32_36 = arith.constant 1 : i32
    %96 = tpu.dynamic_rotate %76 by %c1_i32_36 dim 0 : vector<48x128xf32>, i32 -> vector<48x128xf32>
    %cst_37 = arith.constant 0.000000e+00 : f32
    %97 = vector.broadcast %cst_37 : f32 to vector<48x128xf32>
    %98 = arith.select %95, %97, %96 : vector<48x128xi1>, vector<48x128xf32>
    %c7_i32 = arith.constant 7 : i32
    %99 = vector.broadcast %c7_i32 : i32 to vector<48x128xi32>
    %100 = arith.cmpi eq, %93, %99 : vector<48x128xi32>
    %c47_i32 = arith.constant 47 : i32
    %101 = tpu.dynamic_rotate %76 by %c47_i32 dim 0 : vector<48x128xf32>, i32 -> vector<48x128xf32>
    %cst_38 = arith.constant 0.000000e+00 : f32
    %102 = vector.broadcast %cst_38 : f32 to vector<48x128xf32>
    %103 = arith.select %100, %102, %101 : vector<48x128xi1>, vector<48x128xf32>
    %c1 = arith.constant 1 : index
    %c1_39 = arith.constant 1 : index
    %c0_40 = arith.constant 0 : index
    %104 = vector.load %arg7[%c1, %c1_39, %c0_40] : memref<3x3x128xf32, #tpu.memory_space<vmem>>, vector<1x1x128xf32>
    %105 = vector.shape_cast %104 : vector<1x1x128xf32> to vector<128xf32>
    %106 = vector.shape_cast %105 : vector<128xf32> to vector<1x128xf32>
    %107 = vector.broadcast %106 : vector<1x128xf32> to vector<48x128xf32>
    %108 = arith.mulf %76, %107 : vector<48x128xf32>
    %c0_41 = arith.constant 0 : index
    %c0_42 = arith.constant 0 : index
    %109 = vector.load %arg8[%c0_41, %c0_42] : memref<1x128xf32, #tpu.memory_space<vmem>>, vector<1x128xf32>
    %110 = vector.broadcast %109 : vector<1x128xf32> to vector<48x128xf32>
    %111 = arith.addf %108, %110 : vector<48x128xf32>
    %c1_43 = arith.constant 1 : index
    %c0_44 = arith.constant 0 : index
    %c0_45 = arith.constant 0 : index
    %112 = vector.load %arg7[%c1_43, %c0_44, %c0_45] : memref<3x3x128xf32, #tpu.memory_space<vmem>>, vector<1x1x128xf32>
    %113 = vector.shape_cast %112 : vector<1x1x128xf32> to vector<128xf32>
    %114 = vector.shape_cast %113 : vector<128xf32> to vector<1x128xf32>
    %115 = vector.broadcast %114 : vector<1x128xf32> to vector<48x128xf32>
    %116 = arith.mulf %98, %115 : vector<48x128xf32>
    %117 = arith.addf %111, %116 : vector<48x128xf32>
    %c1_46 = arith.constant 1 : index
    %c2 = arith.constant 2 : index
    %c0_47 = arith.constant 0 : index
    %118 = vector.load %arg7[%c1_46, %c2, %c0_47] : memref<3x3x128xf32, #tpu.memory_space<vmem>>, vector<1x1x128xf32>
    %119 = vector.shape_cast %118 : vector<1x1x128xf32> to vector<128xf32>
    %120 = vector.shape_cast %119 : vector<128xf32> to vector<1x128xf32>
    %121 = vector.broadcast %120 : vector<1x128xf32> to vector<48x128xf32>
    %122 = arith.mulf %103, %121 : vector<48x128xf32>
    %123 = arith.addf %117, %122 : vector<48x128xf32>
    %c0_48 = arith.constant 0 : index
    %c0_49 = arith.constant 0 : index
    %c0_50 = arith.constant 0 : index
    %124 = vector.load %arg7[%c0_48, %c0_49, %c0_50] : memref<3x3x128xf32, #tpu.memory_space<vmem>>, vector<1x1x128xf32>
    %125 = vector.shape_cast %124 : vector<1x1x128xf32> to vector<128xf32>
    %126 = vector.shape_cast %125 : vector<128xf32> to vector<1x128xf32>
    %127 = vector.broadcast %126 : vector<1x128xf32> to vector<48x128xf32>
    %128 = arith.mulf %98, %127 : vector<48x128xf32>
    %c0_51 = arith.constant 0 : index
    %c1_52 = arith.constant 1 : index
    %c0_53 = arith.constant 0 : index
    %129 = vector.load %arg7[%c0_51, %c1_52, %c0_53] : memref<3x3x128xf32, #tpu.memory_space<vmem>>, vector<1x1x128xf32>
    %130 = vector.shape_cast %129 : vector<1x1x128xf32> to vector<128xf32>
    %131 = vector.shape_cast %130 : vector<128xf32> to vector<1x128xf32>
    %132 = vector.broadcast %131 : vector<1x128xf32> to vector<48x128xf32>
    %133 = arith.mulf %76, %132 : vector<48x128xf32>
    %134 = arith.addf %128, %133 : vector<48x128xf32>
    %c0_54 = arith.constant 0 : index
    %c2_55 = arith.constant 2 : index
    %c0_56 = arith.constant 0 : index
    %135 = vector.load %arg7[%c0_54, %c2_55, %c0_56] : memref<3x3x128xf32, #tpu.memory_space<vmem>>, vector<1x1x128xf32>
    %136 = vector.shape_cast %135 : vector<1x1x128xf32> to vector<128xf32>
    %137 = vector.shape_cast %136 : vector<128xf32> to vector<1x128xf32>
    %138 = vector.broadcast %137 : vector<1x128xf32> to vector<48x128xf32>
    %139 = arith.mulf %103, %138 : vector<48x128xf32>
    %140 = arith.addf %134, %139 : vector<48x128xf32>
    %c2_57 = arith.constant 2 : index
    %c0_58 = arith.constant 0 : index
    %c0_59 = arith.constant 0 : index
    %141 = vector.load %arg7[%c2_57, %c0_58, %c0_59] : memref<3x3x128xf32, #tpu.memory_space<vmem>>, vector<1x1x128xf32>
    %142 = vector.shape_cast %141 : vector<1x1x128xf32> to vector<128xf32>
    %143 = vector.shape_cast %142 : vector<128xf32> to vector<1x128xf32>
    %144 = vector.broadcast %143 : vector<1x128xf32> to vector<48x128xf32>
    %145 = arith.mulf %98, %144 : vector<48x128xf32>
    %c2_60 = arith.constant 2 : index
    %c1_61 = arith.constant 1 : index
    %c0_62 = arith.constant 0 : index
    %146 = vector.load %arg7[%c2_60, %c1_61, %c0_62] : memref<3x3x128xf32, #tpu.memory_space<vmem>>, vector<1x1x128xf32>
    %147 = vector.shape_cast %146 : vector<1x1x128xf32> to vector<128xf32>
    %148 = vector.shape_cast %147 : vector<128xf32> to vector<1x128xf32>
    %149 = vector.broadcast %148 : vector<1x128xf32> to vector<48x128xf32>
    %150 = arith.mulf %76, %149 : vector<48x128xf32>
    %151 = arith.addf %145, %150 : vector<48x128xf32>
    %c2_63 = arith.constant 2 : index
    %c2_64 = arith.constant 2 : index
    %c0_65 = arith.constant 0 : index
    %152 = vector.load %arg7[%c2_63, %c2_64, %c0_65] : memref<3x3x128xf32, #tpu.memory_space<vmem>>, vector<1x1x128xf32>
    %153 = vector.shape_cast %152 : vector<1x1x128xf32> to vector<128xf32>
    %154 = vector.shape_cast %153 : vector<128xf32> to vector<1x128xf32>
    %155 = vector.broadcast %154 : vector<1x128xf32> to vector<48x128xf32>
    %156 = arith.mulf %103, %155 : vector<48x128xf32>
    %157 = arith.addf %151, %156 : vector<48x128xf32>
    %c8_i32_66 = arith.constant 8 : i32
    %158 = tpu.dynamic_rotate %140 by %c8_i32_66 dim 0 : vector<48x128xf32>, i32 -> vector<48x128xf32>
    %159 = arith.addf %123, %158 : vector<48x128xf32>
    %c40_i32 = arith.constant 40 : i32
    %160 = tpu.dynamic_rotate %157 by %c40_i32 dim 0 : vector<48x128xf32>, i32 -> vector<48x128xf32>
    %161 = arith.addf %159, %160 : vector<48x128xf32>
    %162 = vector.extract_strided_slice %161 {offsets = [8, 0], sizes = [32, 128], strides = [1, 1]} : vector<48x128xf32> to vector<32x128xf32>
    %cst_67 = arith.constant 5.000000e-01 : f32
    %163 = vector.broadcast %cst_67 : f32 to vector<32x128xf32>
    %164 = arith.mulf %163, %162 : vector<32x128xf32>
    %cst_68 = arith.constant 0.707106769 : f32
    %165 = vector.broadcast %cst_68 : f32 to vector<32x128xf32>
    %166 = arith.mulf %162, %165 : vector<32x128xf32>
    %167 = math.absf %166 : vector<32x128xf32>
    %cst_69 = arith.constant 0.327591091 : f32
    %168 = vector.broadcast %cst_69 : f32 to vector<32x128xf32>
    %169 = arith.mulf %168, %167 : vector<32x128xf32>
    %cst_70 = arith.constant 1.000000e+00 : f32
    %170 = vector.broadcast %cst_70 : f32 to vector<32x128xf32>
    %171 = arith.addf %170, %169 : vector<32x128xf32>
    %172 = tpu.reciprocal %171 {approx = true} : vector<32x128xf32> -> vector<32x128xf32>
    %173 = arith.mulf %171, %172 : vector<32x128xf32>
    %cst_71 = arith.constant 2.000000e+00 : f32
    %174 = vector.broadcast %cst_71 : f32 to vector<32x128xf32>
    %175 = arith.subf %174, %173 : vector<32x128xf32>
    %176 = arith.mulf %172, %175 : vector<32x128xf32>
    %cst_72 = arith.constant 1.06140542 : f32
    %177 = vector.broadcast %cst_72 : f32 to vector<32x128xf32>
    %178 = arith.mulf %176, %177 : vector<32x128xf32>
    %cst_73 = arith.constant -1.45315206 : f32
    %179 = vector.broadcast %cst_73 : f32 to vector<32x128xf32>
    %180 = arith.addf %179, %178 : vector<32x128xf32>
    %181 = arith.mulf %176, %180 : vector<32x128xf32>
    %cst_74 = arith.constant 1.42141378 : f32
    %182 = vector.broadcast %cst_74 : f32 to vector<32x128xf32>
    %183 = arith.addf %182, %181 : vector<32x128xf32>
    %184 = arith.mulf %176, %183 : vector<32x128xf32>
    %cst_75 = arith.constant -0.284496725 : f32
    %185 = vector.broadcast %cst_75 : f32 to vector<32x128xf32>
    %186 = arith.addf %185, %184 : vector<32x128xf32>
    %187 = arith.mulf %176, %186 : vector<32x128xf32>
    %cst_76 = arith.constant 0.254829586 : f32
    %188 = vector.broadcast %cst_76 : f32 to vector<32x128xf32>
    %189 = arith.addf %188, %187 : vector<32x128xf32>
    %190 = arith.mulf %176, %189 : vector<32x128xf32>
    %cst_77 = arith.constant 0.000000e+00 : f32
    %191 = vector.broadcast %cst_77 : f32 to vector<32x128xf32>
    %192 = arith.subf %191, %167 : vector<32x128xf32>
    %193 = arith.mulf %192, %167 : vector<32x128xf32>
    %194 = math.exp %193 : vector<32x128xf32>
    %195 = arith.mulf %190, %194 : vector<32x128xf32>
    %cst_78 = arith.constant 1.000000e+00 : f32
    %196 = vector.broadcast %cst_78 : f32 to vector<32x128xf32>
    %197 = arith.subf %196, %195 : vector<32x128xf32>
    %cst_79 = arith.constant 0.000000e+00 : f32
    %198 = vector.broadcast %cst_79 : f32 to vector<32x128xf32>
    %199 = arith.cmpf oge, %166, %198 : vector<32x128xf32>
    %cst_80 = arith.constant 0.000000e+00 : f32
    %200 = vector.broadcast %cst_80 : f32 to vector<32x128xf32>
    %201 = arith.subf %200, %197 : vector<32x128xf32>
    %202 = arith.select %199, %197, %201 : vector<32x128xi1>, vector<32x128xf32>
    %cst_81 = arith.constant 1.000000e+00 : f32
    %203 = vector.broadcast %cst_81 : f32 to vector<32x128xf32>
    %204 = arith.addf %203, %202 : vector<32x128xf32>
    %205 = arith.mulf %164, %204 : vector<32x128xf32>
    %c0_82 = arith.constant 0 : index
    %c0_83 = arith.constant 0 : index
    %c0_84 = arith.constant 0 : index
    %206 = vector.load %arg9[%c0_82, %c0_83, %c0_84] : memref<1x32x128xf32, #tpu.memory_space<vmem>>, vector<1x32x128xf32>
    %207 = vector.shape_cast %206 : vector<1x32x128xf32> to vector<32x128xf32>
    %208 = vector.shape_cast %205 : vector<32x128xf32> to vector<1x32x128xf32>
    tpu.vector_store %arg9[%c0_82, %c0_83, %c0_84], %208 {strides = array<i32>} : memref<1x32x128xf32, #tpu.memory_space<vmem>>, vector<1x32x128xf32>,
    %cst_85 = arith.constant dense<0.000000e+00> : vector<128xf32>
    %209 = vector.multi_reduction <add>, %205, %cst_85 [0] : vector<32x128xf32> to vector<128xf32>
    %210 = vector.shape_cast %209 : vector<128xf32> to vector<1x128xf32>
    %c0_86 = arith.constant 0 : index
    %c0_87 = arith.constant 0 : index
    %c0_88 = arith.constant 0 : index
    %c0_89 = arith.constant 0 : index
    %211 = vector.load %arg10[%c0_86, %c0_87, %c0_88, %c0_89] : memref<1x1x1x128xf32, #tpu.memory_space<vmem>>, vector<1x1x1x128xf32>
    %212 = vector.shape_cast %211 : vector<1x1x1x128xf32> to vector<1x128xf32>
    %213 = vector.shape_cast %210 : vector<1x128xf32> to vector<1x1x1x128xf32>
    tpu.vector_store %arg10[%c0_86, %c0_87, %c0_88, %c0_89], %213 {strides = array<i32>} : memref<1x1x1x128xf32, #tpu.memory_space<vmem>>, vector<1x1x1x128xf32>,
    return
  }
  func.func @transform_0(%arg0: i32, %arg1: i32) -> (i32, i32, i32) {
    %c0_i32 = arith.constant 0 : i32
    %c0_i32_0 = arith.constant 0 : i32
    return %arg0, %arg1, %c0_i32 : i32, i32, i32
  }
  func.func @transform_1(%arg0: i32, %arg1: i32) -> (i32, i32, i32) {
    %c4_i32 = arith.constant 4 : i32
    %0 = arith.muli %arg1, %c4_i32 : i32
    %c1_i32 = arith.constant 1 : i32
    %1 = arith.subi %0, %c1_i32 : i32
    %c0_i32 = arith.constant 0 : i32
    %2 = arith.maxsi %1, %c0_i32 : i32
    %c0_i32_0 = arith.constant 0 : i32
    %c0_i32_1 = arith.constant 0 : i32
    return %arg0, %2, %c0_i32_0 : i32, i32, i32
  }
  func.func @transform_2(%arg0: i32, %arg1: i32) -> (i32, i32, i32) {
    %c1_i32 = arith.constant 1 : i32
    %0 = arith.addi %arg1, %c1_i32 : i32
    %c4_i32 = arith.constant 4 : i32
    %1 = arith.muli %0, %c4_i32 : i32
    %c7_i32 = arith.constant 7 : i32
    %2 = arith.minsi %1, %c7_i32 : i32
    %c0_i32 = arith.constant 0 : i32
    %c0_i32_0 = arith.constant 0 : i32
    return %arg0, %2, %c0_i32 : i32, i32, i32
  }
  func.func @transform_3(%arg0: i32, %arg1: i32) -> (i32, i32) {
    %c0_i32 = arith.constant 0 : i32
    %c0_i32_0 = arith.constant 0 : i32
    %c0_i32_1 = arith.constant 0 : i32
    return %c0_i32, %c0_i32_0 : i32, i32
  }
  func.func @transform_4(%arg0: i32, %arg1: i32) -> (i32, i32) {
    %c0_i32 = arith.constant 0 : i32
    %c0_i32_0 = arith.constant 0 : i32
    %c0_i32_1 = arith.constant 0 : i32
    return %c0_i32, %c0_i32_0 : i32, i32
  }
  func.func @transform_5(%arg0: i32, %arg1: i32) -> (i32, i32, i32) {
    %c0_i32 = arith.constant 0 : i32
    %c0_i32_0 = arith.constant 0 : i32
    %c0_i32_1 = arith.constant 0 : i32
    %c0_i32_2 = arith.constant 0 : i32
    return %c0_i32, %c0_i32_0, %c0_i32_1 : i32, i32, i32
  }
  func.func @transform_6(%arg0: i32, %arg1: i32) -> (i32, i32) {
    %c0_i32 = arith.constant 0 : i32
    %c0_i32_0 = arith.constant 0 : i32
    %c0_i32_1 = arith.constant 0 : i32
    return %c0_i32, %c0_i32_0 : i32, i32
  }
  func.func @transform_7(%arg0: i32, %arg1: i32) -> (i32, i32, i32) {
    %c0_i32 = arith.constant 0 : i32
    %c0_i32_0 = arith.constant 0 : i32
    return %arg0, %arg1, %c0_i32 : i32, i32, i32
  }
  func.func @transform_8(%arg0: i32, %arg1: i32) -> (i32, i32, i32, i32) {
    %c0_i32 = arith.constant 0 : i32
    %c0_i32_0 = arith.constant 0 : i32
    %c0_i32_1 = arith.constant 0 : i32
    return %arg0, %arg1, %c0_i32, %c0_i32_0 : i32, i32, i32, i32
  }
}

</mosaic_0001>

<llo_original>
// kernel: tpu_custom_call.1
$region0: #{tpu_custom_call.1}
  #allocation0 [shape = 'u32[]', space=smem, size = 0x4, offset = 0x4, fixed_abs, tag = 'smem constant byte address 0x4 - core index']
  #allocation1 [shape = 'u32[72,128]{1,0:T(1,128)}', space=vmem, size = 0x9000, scoped, tag = 'internal scratch']
  %s0 = inlined_call_operand.hbm [shape: f32[2,64,128], index: 0, kind: input, shape index: {}]
  %s1 = inlined_call_operand.hbm [shape: f32[2,64,128], index: 1, kind: input, shape index: {}]
  %s2 = inlined_call_operand.hbm [shape: f32[2,64,128], index: 2, kind: input, shape index: {}]
  %s3 = inlined_call_operand.vmem [shape: f32[1,128], index: 3, kind: input, shape index: {}]
  %s4 = inlined_call_operand.vmem [shape: f32[1,128], index: 4, kind: input, shape index: {}]
  %s5 = inlined_call_operand.hbm [shape: f32[3,3,128], index: 5, kind: input, shape index: {}]
  %s6 = inlined_call_operand.vmem [shape: f32[1,128], index: 6, kind: input, shape index: {}]
  %s7 = inlined_call_operand.hbm [shape: f32[2,64,128], index: 7, kind: output, shape index: {0}]
  %s8 = inlined_call_operand.hbm [shape: f32[2,2,1,128], index: 8, kind: output, shape index: {1}]
  %9 = xla_tuple %s7, %s8
  %s10 = sld [smem:[#allocation0]]
  $region85: #{tpu_custom_call.1} parent=0
    _
  %s12 = ssub.s32 1, %s10
  %s13 = scalar_select 0, %s12, %s10
  $region1: #{tpu_custom_call.1} parent=0
    #allocation2 [shape = 'u8[32768]{0}', space=vmem, size = 0x8000, scoped, tag = 'input window, operand 0']
    #allocation3 [shape = 's32[2]{0}', space=sflag, size = 0x8, scoped, tag = 'scoped memory for tpu_custom_call.1']
    #allocation4 [shape = 's32[2]{0}', space=sflag, size = 0x8, scoped, tag = 'scoped memory for tpu_custom_call.1']
    #allocation5 [shape = 'u8[8192]{0}', space=vmem, size = 0x2000, scoped, tag = 'input window, operand 1']
    #allocation6 [shape = 's32[2]{0}', space=sflag, size = 0x8, scoped, tag = 'scoped memory for tpu_custom_call.1']
    #allocation7 [shape = 'u8[8192]{0}', space=vmem, size = 0x2000, scoped, tag = 'input window, operand 2']
    #allocation8 [shape = 'u8[6144]{0}', space=vmem, size = 0x1800, scoped, tag = 'input window, operand 5, single buffered']
    #allocation9 [shape = 's32[1]{0}', space=sflag, size = 0x4, scoped, tag = 'scoped memory for tpu_custom_call.1']
    #allocation10 [shape = 'u8[32768]{0}', space=vmem, size = 0x8000, scoped, tag = 'output window, operand 0']
    #allocation11 [shape = 'u8[1024]{0}', space=vmem, size = 0x400, scoped, tag = 'output window, operand 1']
    #allocation12 [shape = 's32[2]{0}', space=sflag, size = 0x8, scoped, tag = 'scoped memory for tpu_custom_call.1']
    %14 = vsyncpa [#allocation3], 0
    %s15 = scalar_lea.sflag [#allocation3], 1
    %16 = vsyncpa %s15, 0
    %17 = vsyncpa [#allocation6], 0
    %s18 = scalar_lea.sflag [#allocation6], 1
    %19 = vsyncpa %s18, 0
    %20 = vsyncpa [#allocation9], 0
    %21 = vsyncpa [#allocation4], 0
    %s22 = scalar_lea.sflag [#allocation4], 1
    %23 = vsyncpa %s22, 0
    %24 = vsyncpa [#allocation12], 0
    %s25 = scalar_lea.sflag [#allocation12], 1
    %26 = vsyncpa %s25, 0
    loop: start=0, step=1, limit=6
    $region2: #{tpu_custom_call.1} parent=1 // loop_pre_header
      _
    $region3: #{tpu_custom_call.1} parent=1 // loop_header
      %s28 = sphi 0, %s32
      %p29 = scmp.ge.s32.totalorder %s28, 6
      %s35 = sphi 0, %s47
      %s36 = sphi 0, %s43
      %s37 = sphi 0, %s35
      %s38 = sphi 0, %s36
      %s39 = sphi 0, %s37
      %s40 = sphi 0, %s38
      %s52 = sphi 0, %s54
      %s55 = sphi 0, %s52
      %s56 = sphi 0, %s55
      %s72 = sphi 0, %s56
      %s88 = sphi 0, %s90
      %s91 = sphi 0, %s88
      %s92 = sphi 0, %s91
      %s108 = sphi 0, %s92
      %s124 = sphi 0, %s126
      %s127 = sphi 0, %s124
      %s128 = sphi 0, %s127
      %s144 = sphi 0, %s128
      %s148 = sphi 0, %s148
      %s150 = sphi 0, %s148
      %s151 = sphi 0, %s150
      %s165 = sphi 0, %s151
      %s169 = sphi 0, %s169
      %s171 = sphi 0, %s169
      %s172 = sphi 0, %s171
      %s186 = sphi 0, %s172
      %s190 = sphi 0, %s190
      %s192 = sphi 0, %s190
      %s193 = sphi 0, %s192
      %s207 = sphi 0, %s193
      %s211 = sphi 0, %s211
      %s213 = sphi 0, %s211
      %s214 = sphi 0, %s213
      %s228 = sphi 0, %s214
      %s236 = sphi 0, %s238
      %s239 = sphi 0, %s236
      %s240 = sphi 0, %s239
      %s256 = sphi 0, %s240
      %s264 = sphi 0, %s266
      %s267 = sphi 0, %s264
      %s268 = sphi 0, %s267
      %s284 = sphi 0, %s268
    $region4: #{tpu_custom_call.1} parent=1 // loop_header_branch
      %31 = sbr.rel (%p29) target = $region8
    $region5: #{tpu_custom_call.1} parent=1 // loop_body
      %s33 = ssub.s32 %s28, 1
      %s34 = ssub.s32 %s28, 2
      %s41 = sadd.s32 1, %s36
      %p42 = scmp.ge.s32.totalorder %s41, 2
      %s43 = scalar_select %p42, 0, %s41
      %s44 = sadd.s32 1, %s35
      %s45 = scalar_select %p42, %s44, %s35
      %p46 = scmp.ge.s32.totalorder %s45, 2
      %s47 = scalar_select %p46, 0, %s45
      %s48 = ssub.s32 %s35, %s47
      %s49 = ssub.s32 %s36, %s43
      %s50 = sor.u32 %s48, %s49
      %p51 = scmp.eq.s32.totalorder %s50, 0
      %s53 = sadd.s32 %s52, 1
      %s54 = scalar_select %p51, %s52, %s53
      %p57 = pneg %p51
      %p58 = scmp.eq.s32.totalorder %s28, 3
      %p59 = por %p57, %p58
      %p60 = scmp.ne.s32.totalorder %s52, %s55
      %p61 = scmp.eq.s32.totalorder %s28, 0
      %p62 = por %p60, %p61
      %p63 = scmp.ne.s32.totalorder %s52, %s55
      %p64 = scmp.eq.s32.totalorder %s33, 3
      %p65 = por %p63, %p64
      %p66 = scmp.ne.s32.totalorder %s55, %s56
      %p67 = scmp.eq.s32.totalorder %s33, 0
      %p68 = por %p66, %p67
      %p69 = scmp.ne.s32.totalorder %s55, %s56
      %p70 = scmp.eq.s32.totalorder %s34, 3
      %p71 = por %p69, %p70
      %p73 = scmp.ne.s32.totalorder %s56, %s72
      %p74 = scmp.eq.s32.totalorder %s34, 0
      %p75 = por %p73, %p74
      %s76 = smul.u32 %s36, 4
      %s77 = ssub.s32 %s76, 1
      %p78 = scmp.gt.s32.totalorder %s77, 0
      %s79 = scalar_select %p78, %s77, 0
      %s80 = smul.u32 %s43, 4
      %s81 = ssub.s32 %s80, 1
      %p82 = scmp.gt.s32.totalorder %s81, 0
      %s83 = scalar_select %p82, %s81, 0
      %s84 = ssub.s32 %s35, %s47
      %s85 = ssub.s32 %s79, %s83
      %s86 = sor.u32 %s84, %s85
      %p87 = scmp.eq.s32.totalorder %s86, 0
      %s89 = sadd.s32 %s88, 1
      %s90 = scalar_select %p87, %s88, %s89
      %p93 = pneg %p87
      %p94 = scmp.eq.s32.totalorder %s28, 3
      %p95 = por %p93, %p94
      %p96 = scmp.ne.s32.totalorder %s88, %s91
      %p97 = scmp.eq.s32.totalorder %s28, 0
      %p98 = por %p96, %p97
      %p99 = scmp.ne.s32.totalorder %s88, %s91
      %p100 = scmp.eq.s32.totalorder %s33, 3
      %p101 = por %p99, %p100
      %p102 = scmp.ne.s32.totalorder %s91, %s92
      %p103 = scmp.eq.s32.totalorder %s33, 0
      %p104 = por %p102, %p103
      %p105 = scmp.ne.s32.totalorder %s91, %s92
      %p106 = scmp.eq.s32.totalorder %s34, 3
      %p107 = por %p105, %p106
      %p109 = scmp.ne.s32.totalorder %s92, %s108
      %p110 = scmp.eq.s32.totalorder %s34, 0
      %p111 = por %p109, %p110
      %s112 = sadd.s32 %s36, 1
      %s113 = smul.u32 %s112, 4
      %p114 = scmp.lt.s32.totalorder %s113, 7
      %s115 = scalar_select %p114, %s113, 7
      %s116 = sadd.s32 %s43, 1
      %s117 = smul.u32 %s116, 4
      %p118 = scmp.lt.s32.totalorder %s117, 7
      %s119 = scalar_select %p118, %s117, 7
      %s120 = ssub.s32 %s35, %s47
      %s121 = ssub.s32 %s115, %s119
      %s122 = sor.u32 %s120, %s121
      %p123 = scmp.eq.s32.totalorder %s122, 0
      %s125 = sadd.s32 %s124, 1
      %s126 = scalar_select %p123, %s124, %s125
      %p129 = pneg %p123
      %p130 = scmp.eq.s32.totalorder %s28, 3
      %p131 = por %p129, %p130
      %p132 = scmp.ne.s32.totalorder %s124, %s127
      %p133 = scmp.eq.s32.totalorder %s28, 0
      %p134 = por %p132, %p133
      %p135 = scmp.ne.s32.totalorder %s124, %s127
      %p136 = scmp.eq.s32.totalorder %s33, 3
      %p137 = por %p135, %p136
      %p138 = scmp.ne.s32.totalorder %s127, %s128
      %p139 = scmp.eq.s32.totalorder %s33, 0
      %p140 = por %p138, %p139
      %p141 = scmp.ne.s32.totalorder %s127, %s128
      %p142 = scmp.eq.s32.totalorder %s34, 3
      %p143 = por %p141, %p142
      %p145 = scmp.ne.s32.totalorder %s128, %s144
      %p146 = scmp.eq.s32.totalorder %s34, 0
      %p147 = por %p145, %p146
      %s149 = sadd.s32 %s148, 1
      %p152 = scmp.eq.s32.totalorder %s28, 3
      %p153 = scmp.ne.s32.totalorder %s148, %s150
      %p154 = scmp.eq.s32.totalorder %s28, 0
      %p155 = por %p153, %p154
      %p156 = scmp.ne.s32.totalorder %s148, %s150
      %p157 = scmp.eq.s32.totalorder %s33, 3
      %p158 = por %p156, %p157
      %p159 = scmp.ne.s32.totalorder %s150, %s151
      %p160 = scmp.eq.s32.totalorder %s33, 0
      %p161 = por %p159, %p160
      %p162 = scmp.ne.s32.totalorder %s150, %s151
      %p163 = scmp.eq.s32.totalorder %s34, 3
      %p164 = por %p162, %p163
      %p166 = scmp.ne.s32.totalorder %s151, %s165
      %p167 = scmp.eq.s32.totalorder %s34, 0
      %p168 = por %p166, %p167
      %s170 = sadd.s32 %s169, 1
      %p173 = scmp.eq.s32.totalorder %s28, 3
      %p174 = scmp.ne.s32.totalorder %s169, %s171
      %p175 = scmp.eq.s32.totalorder %s28, 0
      %p176 = por %p174, %p175
      %p177 = scmp.ne.s32.totalorder %s169, %s171
      %p178 = scmp.eq.s32.totalorder %s33, 3
      %p179 = por %p177, %p178
      %p180 = scmp.ne.s32.totalorder %s171, %s172
      %p181 = scmp.eq.s32.totalorder %s33, 0
      %p182 = por %p180, %p181
      %p183 = scmp.ne.s32.totalorder %s171, %s172
      %p184 = scmp.eq.s32.totalorder %s34, 3
      %p185 = por %p183, %p184
      %p187 = scmp.ne.s32.totalorder %s172, %s186
      %p188 = scmp.eq.s32.totalorder %s34, 0
      %p189 = por %p187, %p188
      %s191 = sadd.s32 %s190, 1
      %p194 = scmp.eq.s32.totalorder %s28, 3
      %p195 = scmp.ne.s32.totalorder %s190, %s192
      %p196 = scmp.eq.s32.totalorder %s28, 0
      %p197 = por %p195, %p196
      %p198 = scmp.ne.s32.totalorder %s190, %s192
      %p199 = scmp.eq.s32.totalorder %s33, 3
      %p200 = por %p198, %p199
      %p201 = scmp.ne.s32.totalorder %s192, %s193
      %p202 = scmp.eq.s32.totalorder %s33, 0
      %p203 = por %p201, %p202
      %p204 = scmp.ne.s32.totalorder %s192, %s193
      %p205 = scmp.eq.s32.totalorder %s34, 3
      %p206 = por %p204, %p205
      %p208 = scmp.ne.s32.totalorder %s193, %s207
      %p209 = scmp.eq.s32.totalorder %s34, 0
      %p210 = por %p208, %p209
      %s212 = sadd.s32 %s211, 1
      %p215 = scmp.eq.s32.totalorder %s28, 3
      %p216 = scmp.ne.s32.totalorder %s211, %s213
      %p217 = scmp.eq.s32.totalorder %s28, 0
      %p218 = por %p216, %p217
      %p219 = scmp.ne.s32.totalorder %s211, %s213
      %p220 = scmp.eq.s32.totalorder %s33, 3
      %p221 = por %p219, %p220
      %p222 = scmp.ne.s32.totalorder %s213, %s214
      %p223 = scmp.eq.s32.totalorder %s33, 0
      %p224 = por %p222, %p223
      %p225 = scmp.ne.s32.totalorder %s213, %s214
      %p226 = scmp.eq.s32.totalorder %s34, 3
      %p227 = por %p225, %p226
      %p229 = scmp.ne.s32.totalorder %s214, %s228
      %p230 = scmp.eq.s32.totalorder %s34, 0
      %p231 = por %p229, %p230
      %s232 = ssub.s32 %s35, %s47
      %s233 = ssub.s32 %s36, %s43
      %s234 = sor.u32 %s232, %s233
      %p235 = scmp.eq.s32.totalorder %s234, 0
      %s237 = sadd.s32 %s236, 1
      %s238 = scalar_select %p235, %s236, %s237
      %p241 = pneg %p235
      %p242 = scmp.eq.s32.totalorder %s28, 3
      %p243 = por %p241, %p242
      %p244 = scmp.ne.s32.totalorder %s236, %s239
      %p245 = scmp.eq.s32.totalorder %s28, 0
      %p246 = por %p244, %p245
      %p247 = scmp.ne.s32.totalorder %s236, %s239
      %p248 = scmp.eq.s32.totalorder %s33, 3
      %p249 = por %p247, %p248
      %p250 = scmp.ne.s32.totalorder %s239, %s240
      %p251 = scmp.eq.s32.totalorder %s33, 0
      %p252 = por %p250, %p251
      %p253 = scmp.ne.s32.totalorder %s239, %s240
      %p254 = scmp.eq.s32.totalorder %s34, 3
      %p255 = por %p253, %p254
      %p257 = scmp.ne.s32.totalorder %s240, %s256
      %p258 = scmp.eq.s32.totalorder %s34, 0
      %p259 = por %p257, %p258
      %s260 = ssub.s32 %s35, %s47
      %s261 = ssub.s32 %s36, %s43
      %s262 = sor.u32 %s260, %s261
      %p263 = scmp.eq.s32.totalorder %s262, 0
      %s265 = sadd.s32 %s264, 1
      %s266 = scalar_select %p263, %s264, %s265
      %p269 = pneg %p263
      %p270 = scmp.eq.s32.totalorder %s28, 3
      %p271 = por %p269, %p270
      %p272 = scmp.ne.s32.totalorder %s264, %s267
      %p273 = scmp.eq.s32.totalorder %s28, 0
      %p274 = por %p272, %p273
      %p275 = scmp.ne.s32.totalorder %s264, %s267
      %p276 = scmp.eq.s32.totalorder %s33, 3
      %p277 = por %p275, %p276
      %p278 = scmp.ne.s32.totalorder %s267, %s268
      %p279 = scmp.eq.s32.totalorder %s33, 0
      %p280 = por %p278, %p279
      %p281 = scmp.ne.s32.totalorder %s267, %s268
      %p282 = scmp.eq.s32.totalorder %s34, 3
      %p283 = por %p281, %p282
      %p285 = scmp.ne.s32.totalorder %s268, %s284
      %p286 = scmp.eq.s32.totalorder %s34, 0
      %p287 = por %p285, %p286
      %p288 = scmp.le.s32.totalorder 1, %s28
      %p289 = scmp.lt.s32.totalorder %s28, 5
      %p290 = pnand %p288, %p289
      %p291 = pneg %p290
      // Predicated region
      $region9: #{tpu_custom_call.1} parent=5 // pred_check
        _
      $region10: #{tpu_custom_call.1} parent=5 // pred_check_branch
        %293 = sbr.rel (%p290) target = $region12
      $region11: #{tpu_custom_call.1} parent=5 // pred_region
        %s294 = ssub.s32 %s28, 1
        // Predicated region
        $region13: #{tpu_custom_call.1} parent=11 // pred_check
          %p295 = pneg %p161
        $region14: #{tpu_custom_call.1} parent=11 // pred_check_branch
          %297 = sbr.rel (%p295) target = $region16
        $region15: #{tpu_custom_call.1} parent=11 // pred_region
          _
        $region16: #{tpu_custom_call.1} parent=11 // pred_fallthru
          _
        // Predicated region
        $region17: #{tpu_custom_call.1} parent=11 // pred_check
          %p298 = pneg %p182
        $region18: #{tpu_custom_call.1} parent=11 // pred_check_branch
          %300 = sbr.rel (%p298) target = $region20
        $region19: #{tpu_custom_call.1} parent=11 // pred_region
          _
        $region20: #{tpu_custom_call.1} parent=11 // pred_fallthru
          _
        // Predicated region
        $region21: #{tpu_custom_call.1} parent=11 // pred_check
          %p301 = pneg %p203
        $region22: #{tpu_custom_call.1} parent=11 // pred_check_branch
          %303 = sbr.rel (%p301) target = $region24
        $region23: #{tpu_custom_call.1} parent=11 // pred_region
          %305 = vsyncadd [#allocation9], 0
          %s306 = sshll.u32 %s5, 4
          %s307 = int_to_ptr.hbm [resolvable:$true] %s306
          %s308 = sshll.u32 [#allocation8], 4
          %s309 = int_to_ptr.vmem [resolvable:$true] %s308
          %314 = dma.hbm_to_vmem [thread:$0]  %s307, 192, %s309, [#allocation9], 64, 64, 4
        $region24: #{tpu_custom_call.1} parent=11 // pred_fallthru
          _
        // Predicated region
        $region25: #{tpu_custom_call.1} parent=11 // pred_check
          %p315 = pneg %p224
        $region26: #{tpu_custom_call.1} parent=11 // pred_check_branch
          %317 = sbr.rel (%p315) target = $region28
        $region27: #{tpu_custom_call.1} parent=11 // pred_region
          _
        $region28: #{tpu_custom_call.1} parent=11 // pred_fallthru
          _
      $region12: #{tpu_custom_call.1} parent=5 // pred_fallthru
        _
      %p318 = scmp.lt.s32.totalorder %s28, 4
      // Predicated region
      $region29: #{tpu_custom_call.1} parent=5 // pred_check
        %p319 = pneg %p318
      $region30: #{tpu_custom_call.1} parent=5 // pred_check_branch
        %321 = sbr.rel (%p319) target = $region32
      $region31: #{tpu_custom_call.1} parent=5 // pred_region
        // Predicated region
        $region33: #{tpu_custom_call.1} parent=31 // pred_check
          %p322 = pneg %p62
        $region34: #{tpu_custom_call.1} parent=31 // pred_check_branch
          %324 = sbr.rel (%p322) target = $region36
        $region35: #{tpu_custom_call.1} parent=31 // pred_region
          %s325 = sand.u32 %s52, 1
          %s326 = scalar_lea.sflag [#allocation3], %s325
          %s327 = sand.u32 %s52, 1
          %s328 = smul.addr %s327, 32
          %s329 = scalar_lea.vmem [#allocation2], %s328
          %s330 = smul.u32 4, %s36
          %332 = vsyncadd %s326, 0
          %s333 = smul.addr %s35, 8
          %s334 = sadd.s32 %s330, %s333
          %s335 = smul.addr %s334, 8
          %s336 = scalar_lea.hbm %s0, %s335
          %s337 = sshll.u32 %s336, 4
          %s338 = int_to_ptr.hbm [resolvable:$true] %s337
          %s339 = sshll.u32 %s329, 4
          %s340 = int_to_ptr.vmem [resolvable:$true] %s339
          %345 = dma.hbm_to_vmem [thread:$0]  %s338, 512, %s340, %s326, 128, 128, 8
        $region36: #{tpu_custom_call.1} parent=31 // pred_fallthru
          _
        // Predicated region
        $region37: #{tpu_custom_call.1} parent=31 // pred_check
          %p346 = pneg %p98
        $region38: #{tpu_custom_call.1} parent=31 // pred_check_branch
          %348 = sbr.rel (%p346) target = $region40
        $region39: #{tpu_custom_call.1} parent=31 // pred_region
          %s349 = sand.u32 %s28, 1
          %s350 = scalar_lea.sflag [#allocation6], %s349
          %s351 = sand.u32 %s88, 1
          %s352 = smul.addr %s351, 8
          %s353 = scalar_lea.vmem [#allocation5], %s352
          %s354 = smul.u32 %s36, 4
          %s355 = ssub.s32 %s354, 1
          %p356 = scmp.gt.s32.totalorder %s355, 0
          %s357 = scalar_select %p356, %s355, 0
          %359 = vsyncadd %s350, 0
          %s360 = smul.addr %s35, 8
          %s361 = sadd.s32 %s357, %s360
          %s362 = smul.addr %s361, 8
          %s363 = scalar_lea.hbm %s1, %s362
          %s365 = sshll.u32 %s363, 4
          %s366 = int_to_ptr.hbm [resolvable:$true] %s365
          %s367 = sshll.u32 %s353, 4
          %s368 = int_to_ptr.vmem [resolvable:$true] %s367
          %370 = dma.hbm_to_vmem [thread:$0]  %s366, 128, %s368, %s350
        $region40: #{tpu_custom_call.1} parent=31 // pred_fallthru
          _
        // Predicated region
        $region41: #{tpu_custom_call.1} parent=31 // pred_check
          %p371 = pneg %p134
        $region42: #{tpu_custom_call.1} parent=31 // pred_check_branch
          %373 = sbr.rel (%p371) target = $region44
        $region43: #{tpu_custom_call.1} parent=31 // pred_region
          %s374 = sand.u32 %s28, 1
          %s375 = scalar_lea.sflag [#allocation6], %s374
          %s376 = sand.u32 %s124, 1
          %s377 = smul.addr %s376, 8
          %s378 = scalar_lea.vmem [#allocation7], %s377
          %s379 = sadd.s32 %s36, 1
          %s380 = smul.u32 %s379, 4
          %p381 = scmp.lt.s32.totalorder %s380, 7
          %s382 = scalar_select %p381, %s380, 7
          %384 = vsyncadd %s375, 0
          %s385 = smul.addr %s35, 8
          %s386 = sadd.s32 %s382, %s385
          %s387 = smul.addr %s386, 8
          %s388 = scalar_lea.hbm %s2, %s387
          %s390 = sshll.u32 %s388, 4
          %s391 = int_to_ptr.hbm [resolvable:$true] %s390
          %s392 = sshll.u32 %s378, 4
          %s393 = int_to_ptr.vmem [resolvable:$true] %s392
          %395 = dma.hbm_to_vmem [thread:$0]  %s391, 128, %s393, %s375
        $region44: #{tpu_custom_call.1} parent=31 // pred_fallthru
          _
      $region32: #{tpu_custom_call.1} parent=5 // pred_fallthru
        _
      %p396 = scmp.le.s32.totalorder 1, %s28
      %p397 = scmp.lt.s32.totalorder %s28, 5
      %p398 = pnand %p396, %p397
      %p399 = pneg %p398
      // Predicated region
      $region45: #{tpu_custom_call.1} parent=5 // pred_check
        _
      $region46: #{tpu_custom_call.1} parent=5 // pred_check_branch
        %401 = sbr.rel (%p398) target = $region48
      $region47: #{tpu_custom_call.1} parent=5 // pred_region
        %s402 = ssub.s32 %s28, 1
        %s403 = sand.u32 %s55, 1
        %s404 = scalar_lea.sflag [#allocation3], %s403
        %s405 = sand.u32 %s55, 1
        %s406 = smul.addr %s405, 32
        %s407 = scalar_lea.vmem [#allocation2], %s406
        // Predicated region
        $region49: #{tpu_custom_call.1} parent=47 // pred_check
          %p408 = pneg %p68
        $region50: #{tpu_custom_call.1} parent=47 // pred_check_branch
          %410 = sbr.rel (%p408) target = $region52
        $region51: #{tpu_custom_call.1} parent=47 // pred_region
          %412 = dma.done %s404, 512
        $region52: #{tpu_custom_call.1} parent=47 // pred_fallthru
          _
        %s413 = sand.u32 %s33, 1
        %s414 = scalar_lea.sflag [#allocation6], %s413
        %s415 = sand.u32 %s91, 1
        %s416 = smul.addr %s415, 8
        %s417 = scalar_lea.vmem [#allocation5], %s416
        // Predicated region
        $region53: #{tpu_custom_call.1} parent=47 // pred_check
          %p418 = pneg %p104
        $region54: #{tpu_custom_call.1} parent=47 // pred_check_branch
          %420 = sbr.rel (%p418) target = $region56
        $region55: #{tpu_custom_call.1} parent=47 // pred_region
          %422 = dma.done %s414, 128
        $region56: #{tpu_custom_call.1} parent=47 // pred_fallthru
          _
        %s423 = sand.u32 %s33, 1
        %s424 = scalar_lea.sflag [#allocation6], %s423
        %s425 = sand.u32 %s127, 1
        %s426 = smul.addr %s425, 8
        %s427 = scalar_lea.vmem [#allocation7], %s426
        // Predicated region
        $region57: #{tpu_custom_call.1} parent=47 // pred_check
          %p428 = pneg %p140
        $region58: #{tpu_custom_call.1} parent=47 // pred_check_branch
          %430 = sbr.rel (%p428) target = $region60
        $region59: #{tpu_custom_call.1} parent=47 // pred_region
          %432 = dma.done %s424, 128
        $region60: #{tpu_custom_call.1} parent=47 // pred_fallthru
          _
        // Predicated region
        $region61: #{tpu_custom_call.1} parent=47 // pred_check
          %p433 = pneg %p203
        $region62: #{tpu_custom_call.1} parent=47 // pred_check_branch
          %435 = sbr.rel (%p433) target = $region64
        $region63: #{tpu_custom_call.1} parent=47 // pred_region
          %437 = dma.done [#allocation9], 192
        $region64: #{tpu_custom_call.1} parent=47 // pred_fallthru
          _
        %s438 = sand.u32 %s55, 1
        %s439 = scalar_lea.sflag [#allocation3], %s438
        %s440 = sand.u32 %s55, 1
        %s441 = smul.addr %s440, 32
        %s442 = scalar_lea.vmem [#allocation2], %s441
        %p443 = pneg %p68
        %p444 = pneg %p65
        %s445 = sand.u32 %s33, 1
        %s446 = scalar_lea.sflag [#allocation6], %s445
        %s447 = sand.u32 %s91, 1
        %s448 = smul.addr %s447, 8
        %s449 = scalar_lea.vmem [#allocation5], %s448
        %p450 = pneg %p104
        %p451 = pneg %p101
        %s452 = sand.u32 %s33, 1
        %s453 = scalar_lea.sflag [#allocation6], %s452
        %s454 = sand.u32 %s127, 1
        %s455 = smul.addr %s454, 8
        %s456 = scalar_lea.vmem [#allocation7], %s455
        %p457 = pneg %p140
        %p458 = pneg %p137
        %p459 = pneg %p161
        %p460 = pneg %p158
        %p461 = pneg %p182
        %p462 = pneg %p179
        %p463 = pneg %p203
        %p464 = pneg %p200
        %p465 = pneg %p224
        %p466 = pneg %p221
        %p467 = pneg %p252
        %p468 = pneg %p249
        %s469 = sand.u32 %s239, 1
        %s470 = scalar_lea.sflag [#allocation4], %s469
        %s471 = sand.u32 %s239, 1
        %s472 = smul.addr %s471, 32
        %s473 = scalar_lea.vmem [#allocation10], %s472
        %p474 = pneg %p280
        %p475 = pneg %p277
        %s476 = sand.u32 %s267, 1
        %s477 = scalar_lea.sflag [#allocation12], %s476
        %s478 = sand.u32 %s267, 1
        %s479 = scalar_lea.vmem [#allocation11], %s478
        %s480 = smul.u32 4, %s38
        %s481 = smul.u32 %s38, 4
        %s482 = ssub.s32 %s481, 1
        %p483 = scmp.gt.s32.totalorder %s482, 0
        %s484 = scalar_select %p483, %s482, 0
        %s485 = sadd.s32 %s38, 1
        %s486 = smul.u32 %s485, 4
        %p487 = scmp.lt.s32.totalorder %s486, 7
        %s488 = scalar_select %p487, %s486, 7
        %s489 = smul.u32 4, %s38
        %v490 = vld [vmem:[%s3] sm:$0x1]
        %v491 = vld [vmem:[%s4] sm:$0x1]
        %v492 = vld [vmem:[%s417] sm:$0xff]
        %493 = vadd.xlane.f32.xlu0 %v492
        %v494 = vpop.xlane.xlu0 %493
        %v495 = vrcp.pop 128.0
        %v496 = vmul.f32 128.0, %v495
        %v497 = vsub.f32 1.0, %v496
        %v498 = vmul.f32 %v495, %v497
        %v499 = vadd.f32 %v495, %v498
        %vm500 = vweird.f32 %v495
        %v501 = vsel %vm500, %v495, %v499
        %v502 = vmul.f32 %v494, %v501
        %v503 = vsub.f32 %v492, %v502
        %v504 = vmul.f32 %v503, %v503
        %505 = vadd.xlane.f32.xlu0 %v504
        %v506 = vpop.xlane.xlu0 %505
        %v507 = vmul.f32 %v506, %v501
        %v508 = vadd.f32 %v507, 1e-05
        %v509 = vrsqrt.pop %v508
        %v510 = vmul.f32 %v509, %v508
        %v511 = vmul.f32 %v510, %v509
        %v512 = vmul.f32 0.5, %v511
        %v513 = vsub.f32 1.5, %v512
        %v514 = vmul.f32 %v509, %v513
        %vm515 = vweird.f32 %v508
        %vm516 = vweird.f32 %v509
        %vm517 = vmor %vm515, %vm516
        %v518 = vsel %vm517, %v509, %v514
        %v519 = vmul.f32 %v503, %v518
        %v521 = vperm.slane %v490, 0
        %v523 = vmul.f32 %v519, %v521
        %v525 = vperm.slane %v491, 0
        %v527 = vadd.f32 %v523, %v525
        %p528 = scmp.eq.s32.totalorder %s38, 0
        %s529 = scalar_select %p528, 0.0, 1.0
        %v530 = vstv %s529
        %v531 = vmul.f32 %v527, %v530
        %v532 = vld [vmem:[%s427] sm:$0xff]
        %533 = vadd.xlane.f32.xlu0 %v532
        %v534 = vpop.xlane.xlu0 %533
        %v535 = vmul.f32 %v534, %v501
        %v536 = vsub.f32 %v532, %v535
        %v537 = vmul.f32 %v536, %v536
        %538 = vadd.xlane.f32.xlu0 %v537
        %v539 = vpop.xlane.xlu0 %538
        %v540 = vmul.f32 %v539, %v501
        %v541 = vadd.f32 %v540, 1e-05
        %v542 = vrsqrt.pop %v541
        %v543 = vmul.f32 %v542, %v541
        %v544 = vmul.f32 %v543, %v542
        %v545 = vmul.f32 0.5, %v544
        %v546 = vsub.f32 1.5, %v545
        %v547 = vmul.f32 %v542, %v546
        %vm548 = vweird.f32 %v541
        %vm549 = vweird.f32 %v542
        %vm550 = vmor %vm548, %vm549
        %v551 = vsel %vm550, %v542, %v547
        %v552 = vmul.f32 %v536, %v551
        %v553 = vmul.f32 %v552, %v521
        %v554 = vadd.f32 %v553, %v525
        %p555 = scmp.eq.s32.totalorder %s38, 1
        %s556 = scalar_select %p555, 0.0, 1.0
        %v557 = vstv %s556
        %v558 = vmul.f32 %v554, %v557
        %v559 = vld [vmem:[%s407] sm:$0xff]
        %v560 = vld [vmem:[%s407 + $0x8] sm:$0xff]
        %v561 = vld [vmem:[%s407 + $0x10] sm:$0xff]
        %v562 = vld [vmem:[%s407 + $0x18] sm:$0xff]
        %563 = vadd.xlane.f32.xlu0 %v559
        %v564 = vpop.xlane.xlu0 %563
        %565 = vadd.xlane.f32.xlu0 %v560
        %v566 = vpop.xlane.xlu0 %565
        %567 = vadd.xlane.f32.xlu0 %v561
        %v568 = vpop.xlane.xlu0 %567
        %569 = vadd.xlane.f32.xlu0 %v562
        %v570 = vpop.xlane.xlu0 %569
        %v571 = vmul.f32 %v564, %v501
        %v572 = vmul.f32 %v566, %v501
        %v573 = vmul.f32 %v568, %v501
        %v574 = vmul.f32 %v570, %v501
        %v575 = vsub.f32 %v559, %v571
        %v576 = vsub.f32 %v560, %v572
        %v577 = vsub.f32 %v561, %v573
        %v578 = vsub.f32 %v562, %v574
        %v579 = vmul.f32 %v575, %v575
        %v580 = vmul.f32 %v576, %v576
        %v581 = vmul.f32 %v577, %v577
        %v582 = vmul.f32 %v578, %v578
        %583 = vadd.xlane.f32.xlu0 %v579
        %v584 = vpop.xlane.xlu0 %583
        %585 = vadd.xlane.f32.xlu0 %v580
        %v586 = vpop.xlane.xlu0 %585
        %587 = vadd.xlane.f32.xlu0 %v581
        %v588 = vpop.xlane.xlu0 %587
        %589 = vadd.xlane.f32.xlu0 %v582
        %v590 = vpop.xlane.xlu0 %589
        %v591 = vmul.f32 %v584, %v501
        %v592 = vmul.f32 %v586, %v501
        %v593 = vmul.f32 %v588, %v501
        %v594 = vmul.f32 %v590, %v501
        %v595 = vadd.f32 %v591, 1e-05
        %v596 = vadd.f32 %v592, 1e-05
        %v597 = vadd.f32 %v593, 1e-05
        %v598 = vadd.f32 %v594, 1e-05
        %v599 = vrsqrt.pop %v595
        %v600 = vmul.f32 %v599, %v595
        %v601 = vmul.f32 %v600, %v599
        %v602 = vmul.f32 0.5, %v601
        %v603 = vsub.f32 1.5, %v602
        %v604 = vmul.f32 %v599, %v603
        %vm605 = vweird.f32 %v595
        %vm606 = vweird.f32 %v599
        %vm607 = vmor %vm605, %vm606
        %v608 = vsel %vm607, %v599, %v604
        %v609 = vrsqrt.pop %v596
        %v610 = vmul.f32 %v609, %v596
        %v611 = vmul.f32 %v610, %v609
        %v612 = vmul.f32 0.5, %v611
        %v613 = vsub.f32 1.5, %v612
        %v614 = vmul.f32 %v609, %v613
        %vm615 = vweird.f32 %v596
        %vm616 = vweird.f32 %v609
        %vm617 = vmor %vm615, %vm616
        %v618 = vsel %vm617, %v609, %v614
        %v619 = vrsqrt.pop %v597
        %v620 = vmul.f32 %v619, %v597
        %v621 = vmul.f32 %v620, %v619
        %v622 = vmul.f32 0.5, %v621
        %v623 = vsub.f32 1.5, %v622
        %v624 = vmul.f32 %v619, %v623
        %vm625 = vweird.f32 %v597
        %vm626 = vweird.f32 %v619
        %vm627 = vmor %vm625, %vm626
        %v628 = vsel %vm627, %v619, %v624
        %v629 = vrsqrt.pop %v598
        %v630 = vmul.f32 %v629, %v598
        %v631 = vmul.f32 %v630, %v629
        %v632 = vmul.f32 0.5, %v631
        %v633 = vsub.f32 1.5, %v632
        %v634 = vmul.f32 %v629, %v633
        %vm635 = vweird.f32 %v598
        %vm636 = vweird.f32 %v629
        %vm637 = vmor %vm635, %vm636
        %v638 = vsel %vm637, %v629, %v634
        %v639 = vmul.f32 %v575, %v608
        %v640 = vmul.f32 %v576, %v618
        %v641 = vmul.f32 %v577, %v628
        %v642 = vmul.f32 %v578, %v638
        %v643 = vmul.f32 %v639, %v521
        %v644 = vmul.f32 %v640, %v521
        %v645 = vmul.f32 %v641, %v521
        %v646 = vmul.f32 %v642, %v521
        %v647 = vadd.f32 %v643, %v525
        %v648 = vadd.f32 %v644, %v525
        %v649 = vadd.f32 %v645, %v525
        %v650 = vadd.f32 %v646, %v525
        %v651 = vlaneseq
        %v652 = vshrl.u32 %v651, 7
        %v653 = vadd.s32 %v652, 8
        %v654 = vadd.s32 %v652, 16
        %v655 = vadd.s32 %v652, 24
        %v656 = vadd.s32 %v652, 32
        %v657 = vadd.s32 %v652, 40
        %vm658 = vcmp.lt.s32.totalorder %v652, 0
        %v659 = vsub.s32 0, %v652
        %v660 = vsel %vm658, %v659, %v652
        %v661 = vshrl.u32 %v660, 3
        %v662 = vand.u32 %v660, 7
        %v663 = vsub.s32 0, %v662
        %v664 = vsel %vm658, %v663, %v662
        %vm665 = vcmp.lt.s32.totalorder %v653, 0
        %v666 = vsub.s32 0, %v653
        %v667 = vsel %vm665, %v666, %v653
        %v668 = vshrl.u32 %v667, 3
        %v669 = vand.u32 %v667, 7
        %v670 = vsub.s32 0, %v669
        %v671 = vsel %vm665, %v670, %v669
        %vm672 = vcmp.lt.s32.totalorder %v654, 0
        %v673 = vsub.s32 0, %v654
        %v674 = vsel %vm672, %v673, %v654
        %v675 = vshrl.u32 %v674, 3
        %v676 = vand.u32 %v674, 7
        %v677 = vsub.s32 0, %v676
        %v678 = vsel %vm672, %v677, %v676
        %vm679 = vcmp.lt.s32.totalorder %v655, 0
        %v680 = vsub.s32 0, %v655
        %v681 = vsel %vm679, %v680, %v655
        %v682 = vshrl.u32 %v681, 3
        %v683 = vand.u32 %v681, 7
        %v684 = vsub.s32 0, %v683
        %v685 = vsel %vm679, %v684, %v683
        %vm686 = vcmp.lt.s32.totalorder %v656, 0
        %v687 = vsub.s32 0, %v656
        %v688 = vsel %vm686, %v687, %v656
        %v689 = vshrl.u32 %v688, 3
        %v690 = vand.u32 %v688, 7
        %v691 = vsub.s32 0, %v690
        %v692 = vsel %vm686, %v691, %v690
        %vm693 = vcmp.lt.s32.totalorder %v657, 0
        %v694 = vsub.s32 0, %v657
        %v695 = vsel %vm693, %v694, %v657
        %v696 = vshrl.u32 %v695, 3
        %v697 = vand.u32 %v695, 7
        %v698 = vsub.s32 0, %v697
        %v699 = vsel %vm693, %v698, %v697
        %vm700 = vcmp.ne.s32.totalorder %v664, 0
        %vm701 = vcmp.ne.s32.totalorder %v671, 0
        %vm702 = vcmp.ne.s32.totalorder %v678, 0
        %vm703 = vcmp.ne.s32.totalorder %v685, 0
        %vm704 = vcmp.ne.s32.totalorder %v692, 0
        %vm705 = vcmp.ne.s32.totalorder %v699, 0
        %vm706 = vcmp.lt.s32.totalorder %v664, 0
        %vm707 = vcmp.lt.s32.totalorder %v671, 0
        %vm708 = vcmp.lt.s32.totalorder %v678, 0
        %vm709 = vcmp.lt.s32.totalorder %v685, 0
        %vm710 = vcmp.lt.s32.totalorder %v692, 0
        %vm711 = vcmp.lt.s32.totalorder %v699, 0
        %vm712 = vmand %vm706, %vm700
        %vm713 = vmand %vm707, %vm701
        %vm714 = vmand %vm708, %vm702
        %vm715 = vmand %vm709, %vm703
        %vm716 = vmand %vm710, %vm704
        %vm717 = vmand %vm711, %vm705
        %v718 = vadd.s32 %v664, 8
        %v719 = vadd.s32 %v671, 8
        %v720 = vadd.s32 %v678, 8
        %v721 = vadd.s32 %v685, 8
        %v722 = vadd.s32 %v692, 8
        %v723 = vadd.s32 %v699, 8
        %v724 = vsel %vm712, %v718, %v664
        %v725 = vsel %vm713, %v719, %v671
        %v726 = vsel %vm714, %v720, %v678
        %v727 = vsel %vm715, %v721, %v685
        %v728 = vsel %vm716, %v722, %v692
        %v729 = vsel %vm717, %v723, %v699
        %vm730 = vcmp.eq.s32.totalorder %v724, 0
        %vm731 = vcmp.eq.s32.totalorder %v725, 0
        %vm732 = vcmp.eq.s32.totalorder %v726, 0
        %vm733 = vcmp.eq.s32.totalorder %v727, 0
        %vm734 = vcmp.eq.s32.totalorder %v728, 0
        %vm735 = vcmp.eq.s32.totalorder %v729, 0
        %v736 = vrot.slane %v531, 7
        %v737 = vrot.slane %v647, 7
        %v738 = vrot.slane %v648, 7
        %v739 = vrot.slane %v649, 7
        %v740 = vrot.slane %v650, 7
        %v741 = vrot.slane %v558, 7
        %vm742 = vcmp.lt.s32.totalorder %v652, 1
        %v743 = vsel %vm742, %v740, %v741
        %v744 = vsel %vm742, %v739, %v740
        %v745 = vsel %vm742, %v738, %v739
        %v746 = vsel %vm742, %v737, %v738
        %v747 = vsel %vm742, %v736, %v737
        %v748 = vsel %vm742, %v741, %v736
        %v749 = vsel %vm730, 0.0, %v748
        %v750 = vsel %vm731, 0.0, %v747
        %v751 = vsel %vm732, 0.0, %v746
        %v752 = vsel %vm733, 0.0, %v745
        %v753 = vsel %vm734, 0.0, %v744
        %v754 = vsel %vm735, 0.0, %v743
        %vm755 = vcmp.eq.s32.totalorder %v724, 7
        %vm756 = vcmp.eq.s32.totalorder %v725, 7
        %vm757 = vcmp.eq.s32.totalorder %v726, 7
        %vm758 = vcmp.eq.s32.totalorder %v727, 7
        %vm759 = vcmp.eq.s32.totalorder %v728, 7
        %vm760 = vcmp.eq.s32.totalorder %v729, 7
        %v761 = vrot.slane %v531, 1
        %v762 = vrot.slane %v647, 1
        %v763 = vrot.slane %v648, 1
        %v764 = vrot.slane %v649, 1
        %v765 = vrot.slane %v650, 1
        %v766 = vrot.slane %v558, 1
        %vm767 = vcmp.lt.s32.totalorder %v652, 7
        %v768 = vsel %vm767, %v765, %v766
        %v769 = vsel %vm767, %v764, %v765
        %v770 = vsel %vm767, %v763, %v764
        %v771 = vsel %vm767, %v762, %v763
        %v772 = vsel %vm767, %v761, %v762
        %v773 = vsel %vm767, %v766, %v761
        %v774 = vsel %vm755, 0.0, %v772
        %v775 = vsel %vm756, 0.0, %v771
        %v776 = vsel %vm757, 0.0, %v770
        %v777 = vsel %vm758, 0.0, %v769
        %v778 = vsel %vm759, 0.0, %v768
        %v779 = vsel %vm760, 0.0, %v773
        %s780 = scalar_lea.vmem [#allocation8], 4
        %v781 = vld [vmem:[%s780 + $0x1] sm:$0x1]
        %v782 = vperm.slane %v781, 0
        %v783 = vmul.f32 %v647, %v782
        %v784 = vmul.f32 %v648, %v782
        %v785 = vmul.f32 %v649, %v782
        %v786 = vmul.f32 %v650, %v782
        %v787 = vld [vmem:[%s6] sm:$0x1]
        %v789 = vperm.slane %v787, 0
        %v791 = vadd.f32 %v783, %v789
        %v792 = vadd.f32 %v784, %v789
        %v793 = vadd.f32 %v785, %v789
        %v794 = vadd.f32 %v786, %v789
        %v795 = vld [vmem:[%s780] sm:$0x1]
        %v796 = vperm.slane %v795, 0
        %v797 = vmul.f32 %v750, %v796
        %v798 = vmul.f32 %v751, %v796
        %v799 = vmul.f32 %v752, %v796
        %v800 = vmul.f32 %v753, %v796
        %v801 = vadd.f32 %v791, %v797
        %v802 = vadd.f32 %v792, %v798
        %v803 = vadd.f32 %v793, %v799
        %v804 = vadd.f32 %v794, %v800
        %v805 = vld [vmem:[%s780 + $0x2] sm:$0x1]
        %v806 = vperm.slane %v805, 0
        %v807 = vmul.f32 %v775, %v806
        %v808 = vmul.f32 %v776, %v806
        %v809 = vmul.f32 %v777, %v806
        %v810 = vmul.f32 %v778, %v806
        %v811 = vadd.f32 %v801, %v807
        %v812 = vadd.f32 %v802, %v808
        %v813 = vadd.f32 %v803, %v809
        %v814 = vadd.f32 %v804, %v810
        %v815 = vld [vmem:[#allocation8] sm:$0x1]
        %v816 = vperm.slane %v815, 0
        %v817 = vmul.f32 %v749, %v816
        %v818 = vmul.f32 %v750, %v816
        %v819 = vmul.f32 %v751, %v816
        %v820 = vmul.f32 %v752, %v816
        %v821 = vld [vmem:[#allocation8 + $0x1] sm:$0x1]
        %v822 = vperm.slane %v821, 0
        %v823 = vmul.f32 %v531, %v822
        %v824 = vmul.f32 %v647, %v822
        %v825 = vmul.f32 %v648, %v822
        %v826 = vmul.f32 %v649, %v822
        %v827 = vadd.f32 %v817, %v823
        %v828 = vadd.f32 %v818, %v824
        %v829 = vadd.f32 %v819, %v825
        %v830 = vadd.f32 %v820, %v826
        %v831 = vld [vmem:[#allocation8 + $0x2] sm:$0x1]
        %v832 = vperm.slane %v831, 0
        %v833 = vmul.f32 %v774, %v832
        %v834 = vmul.f32 %v775, %v832
        %v835 = vmul.f32 %v776, %v832
        %v836 = vmul.f32 %v777, %v832
        %v837 = vadd.f32 %v827, %v833
        %v838 = vadd.f32 %v828, %v834
        %v839 = vadd.f32 %v829, %v835
        %v840 = vadd.f32 %v830, %v836
        %s841 = scalar_lea.vmem [#allocation8], 8
        %v842 = vld [vmem:[%s841] sm:$0x1]
        %v843 = vperm.slane %v842, 0
        %v844 = vmul.f32 %v751, %v843
        %v845 = vmul.f32 %v752, %v843
        %v846 = vmul.f32 %v753, %v843
        %v847 = vmul.f32 %v754, %v843
        %v848 = vld [vmem:[%s841 + $0x1] sm:$0x1]
        %v849 = vperm.slane %v848, 0
        %v850 = vmul.f32 %v648, %v849
        %v851 = vmul.f32 %v649, %v849
        %v852 = vmul.f32 %v650, %v849
        %v853 = vmul.f32 %v558, %v849
        %v854 = vadd.f32 %v844, %v850
        %v855 = vadd.f32 %v845, %v851
        %v856 = vadd.f32 %v846, %v852
        %v857 = vadd.f32 %v847, %v853
        %v858 = vld [vmem:[%s841 + $0x2] sm:$0x1]
        %v859 = vperm.slane %v858, 0
        %v860 = vmul.f32 %v776, %v859
        %v861 = vmul.f32 %v777, %v859
        %v862 = vmul.f32 %v778, %v859
        %v863 = vmul.f32 %v779, %v859
        %v864 = vadd.f32 %v854, %v860
        %v865 = vadd.f32 %v855, %v861
        %v866 = vadd.f32 %v856, %v862
        %v867 = vadd.f32 %v857, %v863
        %v868 = vadd.f32 %v811, %v837
        %v869 = vadd.f32 %v812, %v838
        %v870 = vadd.f32 %v813, %v839
        %v871 = vadd.f32 %v814, %v840
        %v872 = vadd.f32 %v868, %v864
        %v873 = vadd.f32 %v869, %v865
        %v874 = vadd.f32 %v870, %v866
        %v875 = vadd.f32 %v871, %v867
        %v876 = vmul.f32 %v872, 0.5
        %v877 = vmul.f32 %v873, 0.5
        %v878 = vmul.f32 %v874, 0.5
        %v879 = vmul.f32 %v875, 0.5
        %v880 = vmul.f32 %v872, 0.70710677
        %v881 = vmul.f32 %v873, 0.70710677
        %v882 = vmul.f32 %v874, 0.70710677
        %v883 = vmul.f32 %v875, 0.70710677
        %v884 = vand.u32 2147483647, %v880
        %v885 = vand.u32 2147483647, %v881
        %v886 = vand.u32 2147483647, %v882
        %v887 = vand.u32 2147483647, %v883
        %v888 = vmul.f32 %v884, 0.3275911
        %v889 = vmul.f32 %v885, 0.3275911
        %v890 = vmul.f32 %v886, 0.3275911
        %v891 = vmul.f32 %v887, 0.3275911
        %v892 = vadd.f32 %v888, 1.0
        %v893 = vadd.f32 %v889, 1.0
        %v894 = vadd.f32 %v890, 1.0
        %v895 = vadd.f32 %v891, 1.0
        %v896 = vrcp.pop %v892
        %v897 = vrcp.pop %v893
        %v898 = vrcp.pop %v894
        %v899 = vrcp.pop %v895
        %v900 = vmul.f32 %v892, %v896
        %v901 = vmul.f32 %v893, %v897
        %v902 = vmul.f32 %v894, %v898
        %v903 = vmul.f32 %v895, %v899
        %v904 = vsub.f32 2.0, %v900
        %v905 = vsub.f32 2.0, %v901
        %v906 = vsub.f32 2.0, %v902
        %v907 = vsub.f32 2.0, %v903
        %v908 = vmul.f32 %v896, %v904
        %v909 = vmul.f32 %v897, %v905
        %v910 = vmul.f32 %v898, %v906
        %v911 = vmul.f32 %v899, %v907
        %v912 = vmul.f32 %v908, 1.0614054
        %v913 = vmul.f32 %v909, 1.0614054
        %v914 = vmul.f32 %v910, 1.0614054
        %v915 = vmul.f32 %v911, 1.0614054
        %v916 = vadd.f32 %v912, -1.4531521
        %v917 = vadd.f32 %v913, -1.4531521
        %v918 = vadd.f32 %v914, -1.4531521
        %v919 = vadd.f32 %v915, -1.4531521
        %v920 = vmul.f32 %v908, %v916
        %v921 = vmul.f32 %v909, %v917
        %v922 = vmul.f32 %v910, %v918
        %v923 = vmul.f32 %v911, %v919
        %v924 = vadd.f32 %v920, 1.4214138
        %v925 = vadd.f32 %v921, 1.4214138
        %v926 = vadd.f32 %v922, 1.4214138
        %v927 = vadd.f32 %v923, 1.4214138
        %v928 = vmul.f32 %v908, %v924
        %v929 = vmul.f32 %v909, %v925
        %v930 = vmul.f32 %v910, %v926
        %v931 = vmul.f32 %v911, %v927
        %v932 = vadd.f32 %v928, -0.28449672
        %v933 = vadd.f32 %v929, -0.28449672
        %v934 = vadd.f32 %v930, -0.28449672
        %v935 = vadd.f32 %v931, -0.28449672
        %v936 = vmul.f32 %v908, %v932
        %v937 = vmul.f32 %v909, %v933
        %v938 = vmul.f32 %v910, %v934
        %v939 = vmul.f32 %v911, %v935
        %v940 = vadd.f32 %v936, 0.2548296
        %v941 = vadd.f32 %v937, 0.2548296
        %v942 = vadd.f32 %v938, 0.2548296
        %v943 = vadd.f32 %v939, 0.2548296
        %v944 = vmul.f32 %v908, %v940
        %v945 = vmul.f32 %v909, %v941
        %v946 = vmul.f32 %v910, %v942
        %v947 = vmul.f32 %v911, %v943
        %v948 = vsub.f32 0.0, %v884
        %v949 = vsub.f32 0.0, %v885
        %v950 = vsub.f32 0.0, %v886
        %v951 = vsub.f32 0.0, %v887
        %v952 = vmul.f32 %v948, %v884
        %v953 = vmul.f32 %v949, %v885
        %v954 = vmul.f32 %v950, %v886
        %v955 = vmul.f32 %v951, %v887
        %v956 = vmul.f32 %v952, 1.442695
        %v957 = vpow.pop %v956
        %v958 = vmul.f32 %v953, 1.442695
        %v959 = vpow.pop %v958
        %v960 = vmul.f32 %v954, 1.442695
        %v961 = vpow.pop %v960
        %v962 = vmul.f32 %v955, 1.442695
        %v963 = vpow.pop %v962
        %v964 = vmul.f32 %v944, %v957
        %v965 = vmul.f32 %v945, %v959
        %v966 = vmul.f32 %v946, %v961
        %v967 = vmul.f32 %v947, %v963
        %v968 = vsub.f32 1.0, %v964
        %v969 = vsub.f32 1.0, %v965
        %v970 = vsub.f32 1.0, %v966
        %v971 = vsub.f32 1.0, %v967
        %vm972 = vcmp.ge.f32.partialorder %v880, 0.0
        %vm973 = vcmp.ge.f32.partialorder %v881, 0.0
        %vm974 = vcmp.ge.f32.partialorder %v882, 0.0
        %vm975 = vcmp.ge.f32.partialorder %v883, 0.0
        %v976 = vsub.f32 0.0, %v968
        %v977 = vsub.f32 0.0, %v969
        %v978 = vsub.f32 0.0, %v970
        %v979 = vsub.f32 0.0, %v971
        %v980 = vsel %vm972, %v968, %v976
        %v981 = vsel %vm973, %v969, %v977
        %v982 = vsel %vm974, %v970, %v978
        %v983 = vsel %vm975, %v971, %v979
        %v984 = vadd.f32 %v980, 1.0
        %v985 = vadd.f32 %v981, 1.0
        %v986 = vadd.f32 %v982, 1.0
        %v987 = vadd.f32 %v983, 1.0
        %v988 = vmul.f32 %v876, %v984
        %v989 = vmul.f32 %v877, %v985
        %v990 = vmul.f32 %v878, %v986
        %v991 = vmul.f32 %v879, %v987
        %992 = vst [vmem:[%s473] sm:$0xff] %v988
        %993 = vst [vmem:[%s473 + $0x8] sm:$0xff] %v989
        %994 = vst [vmem:[%s473 + $0x10] sm:$0xff] %v990
        %995 = vst [vmem:[%s473 + $0x18] sm:$0xff] %v991
        %v996 = vadd.f32 %v988, %v989
        %v997 = vadd.f32 %v996, %v990
        %v998 = vadd.f32 %v997, %v991
        %v999 = vrot.slane %v998, 4
        %v1000 = vadd.f32 %v998, %v999
        %v1001 = vrot.slane %v1000, 2
        %v1002 = vadd.f32 %v1000, %v1001
        %v1003 = vrot.slane %v1002, 1
        %v1004 = vadd.f32 %v1002, %v1003
        %1005 = vst [vmem:[%s479] sm:$0x1] %v1004
        %s1006 = sand.u32 %s239, 1
        %s1007 = scalar_lea.sflag [#allocation4], %s1006
        %s1008 = sand.u32 %s239, 1
        %s1009 = smul.addr %s1008, 32
        %s1010 = scalar_lea.vmem [#allocation10], %s1009
        %s1011 = sand.u32 %s267, 1
        %s1012 = scalar_lea.sflag [#allocation12], %s1011
        %s1013 = sand.u32 %s267, 1
        %s1014 = scalar_lea.vmem [#allocation11], %s1013
        // Predicated region
        $region65: #{tpu_custom_call.1} parent=47 // pred_check
          %p1015 = pneg %p249
        $region66: #{tpu_custom_call.1} parent=47 // pred_check_branch
          %1017 = sbr.rel (%p1015) target = $region68
        $region67: #{tpu_custom_call.1} parent=47 // pred_region
          %s1018 = smul.u32 4, %s38
          %1020 = vsyncadd %s1007, 0
          %s1021 = smul.addr %s37, 8
          %s1022 = sadd.s32 %s1018, %s1021
          %s1023 = smul.addr %s1022, 8
          %s1024 = scalar_lea.hbm %s7, %s1023
          %s1025 = sshll.u32 %s1010, 4
          %s1026 = int_to_ptr.vmem [resolvable:$true] %s1025
          %s1027 = sshll.u32 %s1024, 4
          %s1028 = int_to_ptr.hbm [resolvable:$true] %s1027
          %1033 = dma.vmem_to_hbm [thread:$0]  %s1026, 512, %s1028, %s1007, 128, 128, 8
        $region68: #{tpu_custom_call.1} parent=47 // pred_fallthru
          _
        // Predicated region
        $region69: #{tpu_custom_call.1} parent=47 // pred_check
          %p1034 = pneg %p277
        $region70: #{tpu_custom_call.1} parent=47 // pred_check_branch
          %1036 = sbr.rel (%p1034) target = $region72
        $region71: #{tpu_custom_call.1} parent=47 // pred_region
          %1038 = vsyncadd %s1012, 0
          %s1039 = smul.addr %s37, 2
          %s1040 = sadd.s32 %s38, %s1039
          %s1041 = scalar_lea.hbm %s8, %s1040
          %s1043 = sshll.u32 %s1014, 4
          %s1044 = int_to_ptr.vmem [resolvable:$true] %s1043
          %s1045 = sshll.u32 %s1041, 4
          %s1046 = int_to_ptr.hbm [resolvable:$true] %s1045
          %1048 = dma.vmem_to_hbm [thread:$0]  %s1044, 16, %s1046, %s1012
        $region72: #{tpu_custom_call.1} parent=47 // pred_fallthru
          _
      $region48: #{tpu_custom_call.1} parent=5 // pred_fallthru
        _
      %p1049 = scmp.le.s32.totalorder 2, %s28
      // Predicated region
      $region73: #{tpu_custom_call.1} parent=5 // pred_check
        %p1050 = pneg %p1049
      $region74: #{tpu_custom_call.1} parent=5 // pred_check_branch
        %1052 = sbr.rel (%p1050) target = $region76
      $region75: #{tpu_custom_call.1} parent=5 // pred_region
        %s1053 = ssub.s32 %s28, 2
        // Predicated region
        $region77: #{tpu_custom_call.1} parent=75 // pred_check
          %p1054 = pneg %p255
        $region78: #{tpu_custom_call.1} parent=75 // pred_check_branch
          %1056 = sbr.rel (%p1054) target = $region80
        $region79: #{tpu_custom_call.1} parent=75 // pred_region
          %s1057 = sand.u32 %s240, 1
          %s1058 = scalar_lea.sflag [#allocation4], %s1057
          %s1059 = sand.u32 %s240, 1
          %s1060 = smul.addr %s1059, 32
          %s1061 = scalar_lea.vmem [#allocation10], %s1060
          %1063 = dma.done %s1058, 512
        $region80: #{tpu_custom_call.1} parent=75 // pred_fallthru
          _
        // Predicated region
        $region81: #{tpu_custom_call.1} parent=75 // pred_check
          %p1064 = pneg %p283
        $region82: #{tpu_custom_call.1} parent=75 // pred_check_branch
          %1066 = sbr.rel (%p1064) target = $region84
        $region83: #{tpu_custom_call.1} parent=75 // pred_region
          %s1067 = sand.u32 %s268, 1
          %s1068 = scalar_lea.sflag [#allocation12], %s1067
          %s1069 = sand.u32 %s268, 1
          %s1070 = scalar_lea.vmem [#allocation11], %s1069
          %1072 = dma.done %s1068, 16
        $region84: #{tpu_custom_call.1} parent=75 // pred_fallthru
          _
      $region76: #{tpu_custom_call.1} parent=5 // pred_fallthru
        _
    $region6: #{tpu_custom_call.1} parent=1 // loop_footer
      %s32 = sadd.s32 1, %s28
    $region7: #{tpu_custom_call.1} parent=1 // loop_footer_branch
      %27 = sbr.rel target = $region3
    $region8: #{tpu_custom_call.1} parent=1 // loop_exit
      _
    %1073 = vsyncpa [#allocation3], 1
    %s1074 = scalar_lea.sflag [#allocation3], 1
    %1075 = vsyncpa %s1074, 1
    %1076 = vsyncpa [#allocation6], 1
    %s1077 = scalar_lea.sflag [#allocation6], 1
    %1078 = vsyncpa %s1077, 1
    %1079 = vsyncpa [#allocation9], 1
    %1080 = vsyncpa [#allocation4], 1
    %s1081 = scalar_lea.sflag [#allocation4], 1
    %1082 = vsyncpa %s1081, 1
    %1083 = vsyncpa [#allocation12], 1
    %s1084 = scalar_lea.sflag [#allocation12], 1
    %1085 = vsyncpa %s1084, 1

</llo_original>
